<compile_context>
chip_gen: v7x
topology: tpu7x:2x2x1
jax: 0.10.0
libtpu: 0.0.40
codegen_flags: <defaults>
</compile_context>

<pallas_src>
from functools import partial

import numpy as np
import jax
import jax.numpy as jnp
from jax.experimental import pallas as pl
from jax.experimental.pallas import tpu as pltpu

# ----------------------------- synthetic config ------------------------------
IN_CHANNELS = 11          # S2_FULL_BANDS minus ['B01', 'B10']
DIM_Z_PHY = 7             # RTM params: N, cab, cw, cm, LAI, LAIu, fc
DIM_Z_AUX = 4
NUM_UNITS_FEAT = 32
HID_FEAT = [32, 32]
HID_Z_AUX = [16]
HID_Z_PHY = [16]
BATCH = 8
SD = 500.0

# synthetic physical-parameter ranges (the module loads these from JSON)
RTM_RANGES = {
    'N':    (1.0, 3.0),
    'cab':  (10.0, 80.0),
    'cw':   (0.002, 0.05),
    'cm':   (0.002, 0.02),
    'LAI':  (0.1, 7.0),
    'LAIu': (0.01, 1.0),
    'fc':   (0.1, 1.0),
}
FC_MIN = float(RTM_RANGES['fc'][0])
FC_DELTA = float(RTM_RANGES['fc'][1] - RTM_RANGES['fc'][0])

# folded physics constants:
#   cd   = 2*sqrt(fc*10000/(pi*SD))        = exp(0.5*log(fc) + CD_CONST)
#   hcan = exp(2.117 + 0.507*log(cd))      = exp(H_COEF*log(fc) + H_CONST)
_CD_CONST = float(np.log(2.0) + 0.5 * np.log(10000.0 / (np.pi * SD)))
_H_COEF = 0.507 * 0.5
_H_CONST = float(2.117 + 0.507 * _CD_CONST)

# ----------------------------- packed param layout ----------------------------
SLAB_COLS = 128                                     # lane-padded slab width
PACK_WIDTH = 2 * DIM_Z_PHY + 2 * DIM_Z_AUX + IN_CHANNELS   # 33 real output cols
OUT_COLS = 128                                      # lane-dense output slab

_PARAM_SPECS = [
    # shared feature extractor MLP([11, 32, 32, 32])
    ('wf1', (IN_CHANNELS, 32)), ('bf1', (1, 32)),
    ('wf2', (32, 32)),          ('bf2', (1, 32)),
    ('wf3', (32, NUM_UNITS_FEAT)), ('bf3', (1, NUM_UNITS_FEAT)),
    # fused aux heads: [z_aux_mean | z_aux_lnvar | unmixer]
    ('wah1', (NUM_UNITS_FEAT, 3 * HID_Z_AUX[0])), ('bah1', (1, 3 * HID_Z_AUX[0])),
    ('wah2', (3 * HID_Z_AUX[0], 2 * DIM_Z_AUX + IN_CHANNELS)),
    ('bah2', (1, 2 * DIM_Z_AUX + IN_CHANNELS)),
    # fused phy heads: [z_phy_mean | z_phy_lnvar]
    ('wph1', (NUM_UNITS_FEAT, 2 * HID_Z_PHY[0])), ('bph1', (1, 2 * HID_Z_PHY[0])),
    ('wph2', (2 * HID_Z_PHY[0], 2 * DIM_Z_PHY)),  ('bph2', (1, 2 * DIM_Z_PHY)),
    # physics surrogate (rescale + band select + standardization folded in)
    ('w_phys', (DIM_Z_PHY, IN_CHANNELS)), ('phys_rows', (3, IN_CHANNELS)),
    # decoder aux_expand MLP([7+4, 32, 64, 11]) with split first layer
    ('we_zphy', (DIM_Z_PHY, 32)), ('we_zaux', (DIM_Z_AUX, 32)), ('be1', (1, 32)),
    ('we2', (32, 64)), ('be2', (1, 64)),
    ('we3', (64, IN_CHANNELS)), ('be3', (1, IN_CHANNELS)),
    # decoder correction MLP([11+11, 44, 11]) with split first layer
    ('wc_xp', (IN_CHANNELS, 4 * IN_CHANNELS)), ('wc_exp', (IN_CHANNELS, 4 * IN_CHANNELS)),
    ('bc1', (1, 4 * IN_CHANNELS)),
    ('wc2', (4 * IN_CHANNELS, IN_CHANNELS)), ('bc2', (1, IN_CHANNELS)),
]


def _round_up(v, m):
    return ((v + m - 1) // m) * m


def _compute_offsets():
    offs = {}
    r = 0
    for name, shape in _PARAM_SPECS:
        offs[name] = (r, shape)
        r += _round_up(shape[0], 8)        # every array starts on an 8-row boundary
    return offs, _round_up(r, 8)


_OFFSETS, SLAB_ROWS = _compute_offsets()


# ------------------------------- fused kernel --------------------------------
def _softplus(y):
    # matches torch.nn.Softplus (threshold=20)
    return jnp.where(y > 20.0, y, jnp.log1p(jnp.exp(jnp.minimum(y, 20.0))))


def _fused_phys_vae_kernel(*refs, hard_z):
    if hard_z:
        x_ref, slab_ref, out_ref = refs
        eps_ref = None
    else:
        x_ref, eps_ref, slab_ref, out_ref = refs

    def p(name):
        r0, (r, c) = _OFFSETS[name]
        return slab_ref[r0:r0 + r, 0:c]

    def prow(name, i):
        r0, (_, c) = _OFFSETS[name]
        return slab_ref[r0 + i:r0 + i + 1, 0:c]

    def dense(h, wname, bname, relu=False):
        y = jnp.dot(h, p(wname), preferred_element_type=jnp.float32) + p(bname)
        return jnp.maximum(y, 0.0) if relu else y

    def feat(h):  # MLP([11, 32, 32, 32]) with relu between layers
        h = dense(h, 'wf1', 'bf1', True)
        h = dense(h, 'wf2', 'bf2', True)
        return dense(h, 'wf3', 'bf3')

    x = x_ref[...]

    # -------- encode: aux branch --------
    feature_aux = feat(x)
    h_aux = dense(feature_aux, 'wah1', 'bah1', True)       # (B, 48) fused first layers
    y_aux = dense(h_aux, 'wah2', 'bah2')                    # (B, 4+4+11) block-diag
    z_aux_mean = y_aux[:, 0:DIM_Z_AUX]
    z_aux_lnvar = y_aux[:, DIM_Z_AUX:2 * DIM_Z_AUX]
    coeff = jnp.tanh(y_aux[:, 2 * DIM_Z_AUX:2 * DIM_Z_AUX + IN_CHANNELS])

    # -------- encode: phys branch (unmix, re-extract features) --------
    feature_phy = feat(x * coeff)
    h_phy = dense(feature_phy, 'wph1', 'bph1', True)        # (B, 32) fused first layers
    y_phy = dense(h_phy, 'wph2', 'bph2')                    # (B, 7+7) block-diag
    z_phy_mean = _softplus(y_phy[:, 0:DIM_Z_PHY])
    z_phy_lnvar = y_phy[:, DIM_Z_PHY:2 * DIM_Z_PHY]

    # -------- draw (reparameterize, in-kernel clamp) --------
    if hard_z:
        z_phy = jnp.clip(z_phy_mean, 0.0, 1.0)
        z_aux = z_aux_mean
    else:
        eps = eps_ref[...]
        eps_phy = eps[:, 0:DIM_Z_PHY]
        eps_aux = eps[:, DIM_Z_PHY:DIM_Z_PHY + DIM_Z_AUX]
        z_phy = jnp.clip(
            z_phy_mean + jnp.exp(0.5 * z_phy_lnvar) * eps_phy, 0.0, 1.0)
        z_aux = z_aux_mean + jnp.exp(0.5 * z_aux_lnvar) * eps_aux

    # -------- physics (Physics_RTM forward) --------
    # TODO(synk): the real RTM().run radiative-transfer model is not available
    # (external code + data files); use a deterministic linear surrogate over
    # the rescaled physical parameters.  The [0,1]->physical rescale, the band
    # selection and the (out - x_mean)/x_scale standardization are folded into
    # w_phys / phys_rows at parameter-prep time (exact reciprocal, no divide).
    fc = jnp.maximum(z_phy[:, DIM_Z_PHY - 1:DIM_Z_PHY] * FC_DELTA + FC_MIN, 1e-6)
    lf = jnp.log(fc)                          # one log, then two independent exps
    cd = jnp.exp(0.5 * lf + _CD_CONST)
    hcan = jnp.exp(_H_COEF * lf + _H_CONST)
    x_P = (jnp.dot(z_phy, p('w_phys'), preferred_element_type=jnp.float32)
           + cd * prow('phys_rows', 0) + hcan * prow('phys_rows', 1)
           + prow('phys_rows', 2))

    # -------- decode: aux_expand MLP([7+4, 32, 64, 11]) --------
    h = jnp.maximum(
        jnp.dot(z_phy, p('we_zphy'), preferred_element_type=jnp.float32)
        + jnp.dot(z_aux, p('we_zaux'), preferred_element_type=jnp.float32)
        + p('be1'), 0.0)
    h = dense(h, 'we2', 'be2', True)
    expanded = dense(h, 'we3', 'be3')

    # -------- decode: correction MLP([11+11, 44, 11]) --------
    h = jnp.maximum(
        jnp.dot(x_P, p('wc_xp'), preferred_element_type=jnp.float32)
        + jnp.dot(expanded, p('wc_exp'), preferred_element_type=jnp.float32)
        + p('bc1'), 0.0)
    x_PB = dense(h, 'wc2', 'bc2')

    # -------- emit one lane-dense output slab (single unmasked store) --------
    rows = x.shape[0]
    pad = jnp.zeros((rows, OUT_COLS - PACK_WIDTH), jnp.float32)
    out_ref[...] = jnp.concatenate(
        [z_phy_mean, z_phy_lnvar, z_aux_mean, z_aux_lnvar, x_PB, pad], axis=1)


# --------------------------------- wrapper ------------------------------------
def phys_vae_forward(slab, x, eps_phy=None, eps_aux=None, hard_z=False, row_tile=256):
    n = x.shape[0]
    rt = min(row_tile, _round_up(n, 8))
    n_pad = _round_up(n, rt)
    grid = (n_pad // rt,)

    x_in = x if n_pad == n else jnp.pad(x, ((0, n_pad - n), (0, 0)))
    inputs = [x_in]
    in_specs = [pl.BlockSpec((rt, IN_CHANNELS), lambda i: (i, 0))]

    if not hard_z:
        eps = jnp.concatenate([eps_phy, eps_aux], axis=1)      # (n, 11) single DMA
        if n_pad != n:
            eps = jnp.pad(eps, ((0, n_pad - n), (0, 0)))
        inputs.append(eps)
        in_specs.append(pl.BlockSpec((rt, DIM_Z_PHY + DIM_Z_AUX), lambda i: (i, 0)))

    # weight slab: full block, constant index_map -> DMA'd once, resident in VMEM
    inputs.append(slab)
    in_specs.append(pl.BlockSpec((SLAB_ROWS, SLAB_COLS), lambda i: (0, 0)))

    out = pl.pallas_call(
        partial(_fused_phys_vae_kernel, hard_z=hard_z),
        out_shape=jax.ShapeDtypeStruct((n_pad, OUT_COLS), jnp.float32),
        grid=grid,
        in_specs=in_specs,
        out_specs=pl.BlockSpec((rt, OUT_COLS), lambda i: (i, 0)),
        compiler_params=pltpu.CompilerParams(
            dimension_semantics=("parallel",)),     # shards batch over 2 TCs on v7x
    )(*inputs)

    out = out[:n]
    o = 0
    zpm = out[:, o:o + DIM_Z_PHY]; o += DIM_Z_PHY
    zpl = out[:, o:o + DIM_Z_PHY]; o += DIM_Z_PHY
    zam = out[:, o:o + DIM_Z_AUX]; o += DIM_Z_AUX
    zal = out[:, o:o + DIM_Z_AUX]; o += DIM_Z_AUX
    xpb = out[:, o:o + IN_CHANNELS]
    return {'mean': zpm, 'lnvar': zpl}, {'mean': zam, 'lnvar': zal}, xpb


# ------------------------------ parameter setup -------------------------------
def init_mlp(key, dims):
    """PyTorch nn.Linear default init: U(-1/sqrt(fan_in), 1/sqrt(fan_in))."""
    params = []
    for i in range(len(dims) - 1):
        key, k1, k2 = jax.random.split(key, 3)
        bound = 1.0 / float(np.sqrt(dims[i]))
        W = jax.random.uniform(k1, (dims[i], dims[i + 1]), jnp.float32, -bound, bound)
        b = jax.random.uniform(k2, (1, dims[i + 1]), jnp.float32, -bound, bound)
        params.append((W, b))
    return params


def init_physics_raw(key):
    names = list(RTM_RANGES.keys())
    mins = jnp.array([[RTM_RANGES[k][0] for k in names]], jnp.float32)
    deltas = jnp.array([[RTM_RANGES[k][1] - RTM_RANGES[k][0] for k in names]], jnp.float32)
    k1, k2, k3, k4, k5, k6 = jax.random.split(key, 6)
    full_bands = 13
    bands_index = jnp.array([i for i in range(full_bands) if i not in (0, 10)])  # drop B01, B10
    W = (jax.random.normal(k1, (DIM_Z_PHY, full_bands), jnp.float32) * 0.1)[:, bands_index]
    Wcd = (jax.random.normal(k2, (1, full_bands), jnp.float32) * 0.1)[:, bands_index]
    Wh = (jax.random.normal(k3, (1, full_bands), jnp.float32) * 0.1)[:, bands_index]
    b = (jax.random.normal(k4, (1, full_bands), jnp.float32) * 0.1)[:, bands_index]
    x_mean = jax.random.normal(k5, (1, IN_CHANNELS), jnp.float32) * 0.1
    x_scale = jnp.abs(jax.random.normal(k6, (1, IN_CHANNELS), jnp.float32)) + 1.0
    return dict(mins=mins, deltas=deltas, W=W, Wcd=Wcd, Wh=Wh, b=b,
                x_mean=x_mean, x_scale=x_scale)


def fold_physics(phys):
    """Fold rescale (z*delta+min), band-selected surrogate, and the
    (out - x_mean)/x_scale standardization into one weight + a (3,11) row pack."""
    inv_xs = 1.0 / phys['x_scale']                            # exact precomputed reciprocal
    w_phys = phys['deltas'].T * phys['W'] * inv_xs            # (7, 11)
    wcd_s = phys['Wcd'] * inv_xs                              # (1, 11)
    wh_s = phys['Wh'] * inv_xs                                # (1, 11)
    b_s = (phys['mins'] @ phys['W'] + phys['b'] - phys['x_mean']) * inv_xs
    phys_rows = jnp.concatenate([wcd_s, wh_s, b_s], axis=0)   # (3, 11)
    return w_phys, phys_rows


def block_diag(blocks):
    rows = sum(b.shape[0] for b in blocks)
    cols = sum(b.shape[1] for b in blocks)
    out = np.zeros((rows, cols), np.float32)
    r = c = 0
    for blk in blocks:
        bb = np.asarray(blk)
        out[r:r + bb.shape[0], c:c + bb.shape[1]] = bb
        r += bb.shape[0]
        c += bb.shape[1]
    return jnp.asarray(out)


def build_fused_params(key):
    ks = jax.random.split(key, 9)
    func_feat = init_mlp(ks[0], [IN_CHANNELS] + HID_FEAT + [NUM_UNITS_FEAT])
    z_aux_mean = init_mlp(ks[1], [NUM_UNITS_FEAT] + HID_Z_AUX + [DIM_Z_AUX])
    z_aux_lnvar = init_mlp(ks[2], [NUM_UNITS_FEAT] + HID_Z_AUX + [DIM_Z_AUX])
    z_phy_mean = init_mlp(ks[3], [NUM_UNITS_FEAT] + HID_Z_PHY + [DIM_Z_PHY])
    z_phy_lnvar = init_mlp(ks[4], [NUM_UNITS_FEAT] + HID_Z_PHY + [DIM_Z_PHY])
    unmixer = init_mlp(ks[5], [NUM_UNITS_FEAT] + HID_Z_PHY + [IN_CHANNELS])
    aux_expand = init_mlp(ks[6], [DIM_Z_PHY + DIM_Z_AUX, 32, 64, IN_CHANNELS])
    correction = init_mlp(ks[7], [2 * IN_CHANNELS, 4 * IN_CHANNELS, IN_CHANNELS])
    phys_raw = init_physics_raw(ks[8])

    # --- fuse the three aux heads (shared feature_aux input) ---
    wah1 = jnp.concatenate([z_aux_mean[0][0], z_aux_lnvar[0][0], unmixer[0][0]], axis=1)  # (32,48)
    bah1 = jnp.concatenate([z_aux_mean[0][1], z_aux_lnvar[0][1], unmixer[0][1]], axis=1)  # (1,48)
    wah2 = block_diag([z_aux_mean[1][0], z_aux_lnvar[1][0], unmixer[1][0]])               # (48,19)
    bah2 = jnp.concatenate([z_aux_mean[1][1], z_aux_lnvar[1][1], unmixer[1][1]], axis=1)  # (1,19)

    # --- fuse the two phy heads (shared feature_phy input) ---
    wph1 = jnp.concatenate([z_phy_mean[0][0], z_phy_lnvar[0][0]], axis=1)                 # (32,32)
    bph1 = jnp.concatenate([z_phy_mean[0][1], z_phy_lnvar[0][1]], axis=1)                 # (1,32)
    wph2 = block_diag([z_phy_mean[1][0], z_phy_lnvar[1][0]])                              # (32,14)
    bph2 = jnp.concatenate([z_phy_mean[1][1], z_phy_lnvar[1][1]], axis=1)                 # (1,14)

    w_phys, phys_rows = fold_physics(phys_raw)

    # --- decoder: split first-layer weights so concatenations never materialize ---
    we1, be1 = aux_expand[0]
    we_zphy, we_zaux = we1[:DIM_Z_PHY, :], we1[DIM_Z_PHY:, :]
    we2, be2 = aux_expand[1]
    we3, be3 = aux_expand[2]
    wc1, bc1 = correction[0]
    wc_xp, wc_exp = wc1[:IN_CHANNELS, :], wc1[IN_CHANNELS:, :]
    wc2, bc2 = correction[1]

    flat = [
        func_feat[0][0], func_feat[0][1], func_feat[1][0], func_feat[1][1],
        func_feat[2][0], func_feat[2][1],
        wah1, bah1, wah2, bah2,
        wph1, bph1, wph2, bph2,
        w_phys, phys_rows,
        we_zphy, we_zaux, be1, we2, be2, we3, be3,
        wc_xp, wc_exp, bc1, wc2, bc2,
    ]
    return flat


def pack_params(flat):
    """Pack all arrays into one (SLAB_ROWS, 128) f32 slab; every array starts
    on an 8-row (sublane-tile) boundary so in-kernel static views are free."""
    assert len(flat) == len(_PARAM_SPECS)
    slab = np.zeros((SLAB_ROWS, SLAB_COLS), np.float32)
    for (name, shape), arr in zip(_PARAM_SPECS, flat):
        a = np.asarray(arr, np.float32)
        assert a.shape == shape, (name, a.shape, shape)
        r0 = _OFFSETS[name][0]
        slab[r0:r0 + shape[0], 0:shape[1]] = a
    return jnp.asarray(slab)


# ------------------------- pure-JAX reference (checking) ----------------------
def reference_forward(flat, x, eps_phy, eps_aux, hard_z=False):
    (wf1, bf1, wf2, bf2, wf3, bf3,
     wah1, bah1, wah2, bah2,
     wph1, bph1, wph2, bph2,
     w_phys, phys_rows,
     we_zphy, we_zaux, be1, we2, be2, we3, be3,
     wc_xp, wc_exp, bc1, wc2, bc2) = flat
    dot = partial(jnp.dot, precision=jax.lax.Precision.HIGHEST)
    relu = lambda v: jnp.maximum(v, 0.0)

    def feat(h):
        h = relu(dot(h, wf1) + bf1)
        h = relu(dot(h, wf2) + bf2)
        return dot(h, wf3) + bf3

    feature_aux = feat(x)
    y_aux = dot(relu(dot(feature_aux, wah1) + bah1), wah2) + bah2
    z_aux_mean = y_aux[:, :DIM_Z_AUX]
    z_aux_lnvar = y_aux[:, DIM_Z_AUX:2 * DIM_Z_AUX]
    coeff = jnp.tanh(y_aux[:, 2 * DIM_Z_AUX:])
    feature_phy = feat(x * coeff)
    y_phy = dot(relu(dot(feature_phy, wph1) + bph1), wph2) + bph2
    zm = y_phy[:, :DIM_Z_PHY]
    z_phy_mean = jnp.where(zm > 20.0, zm, jnp.log1p(jnp.exp(jnp.minimum(zm, 20.0))))
    z_phy_lnvar = y_phy[:, DIM_Z_PHY:]
    if hard_z:
        z_phy = jnp.clip(z_phy_mean, 0.0, 1.0)
        z_aux = z_aux_mean
    else:
        z_phy = jnp.clip(z_phy_mean + jnp.exp(0.5 * z_phy_lnvar) * eps_phy, 0.0, 1.0)
        z_aux = z_aux_mean + jnp.exp(0.5 * z_aux_lnvar) * eps_aux
    # original (sqrt -> log -> exp) formulation, to verify the folded-constant form
    fc = jnp.maximum(z_phy[:, DIM_Z_PHY - 1:] * FC_DELTA + FC_MIN, 1e-6)
    cd = jnp.sqrt(fc * 10000.0 / (jnp.pi * SD)) * 2.0
    hcan = jnp.exp(2.117 + 0.507 * jnp.log(cd))
    x_P = dot(z_phy, w_phys) + cd * phys_rows[0:1] + hcan * phys_rows[1:2] + phys_rows[2:3]
    h = relu(dot(z_phy, we_zphy) + dot(z_aux, we_zaux) + be1)
    h = relu(dot(h, we2) + be2)
    expanded = dot(h, we3) + be3
    h = relu(dot(x_P, wc_xp) + dot(expanded, wc_exp) + bc1)
    x_PB = dot(h, wc2) + bc2
    return ({'mean': z_phy_mean, 'lnvar': z_phy_lnvar},
            {'mean': z_aux_mean, 'lnvar': z_aux_lnvar}, x_PB)


# ------------------------------------ main -------------------------------------
if __name__ == "__main__":
    key = jax.random.PRNGKey(0)
    k_param, k_x, k_ephy, k_eaux = jax.random.split(key, 4)

    flat_params = build_fused_params(k_param)
    slab = pack_params(flat_params)
    x = jax.random.normal(k_x, (BATCH, IN_CHANNELS), jnp.float32)
    eps_phy = jax.random.normal(k_ephy, (BATCH, DIM_Z_PHY), jnp.float32)
    eps_aux = jax.random.normal(k_eaux, (BATCH, DIM_Z_AUX), jnp.float32)

    fwd = jax.jit(phys_vae_forward, static_argnames=('hard_z', 'row_tile'))

    # training path (reparameterized draw inside the kernel)
    z_phy_stat, z_aux_stat, x_mean = fwd(slab, x, eps_phy, eps_aux, hard_z=False)
    jax.block_until_ready((z_phy_stat, z_aux_stat, x_mean))

    assert z_phy_stat['mean'].shape == (BATCH, DIM_Z_PHY)
    assert z_phy_stat['lnvar'].shape == (BATCH, DIM_Z_PHY)
    assert z_aux_stat['mean'].shape == (BATCH, DIM_Z_AUX)
    assert z_aux_stat['lnvar'].shape == (BATCH, DIM_Z_AUX)
    assert x_mean.shape == (BATCH, IN_CHANNELS)
    assert bool(jnp.all(jnp.isfinite(x_mean)))

    # numerical check against a pure-JAX reference of the same computation
    r_phy, r_aux, r_x = reference_forward(flat_params, x, eps_phy, eps_aux, hard_z=False)
    assert np.allclose(np.asarray(z_phy_stat['mean']), np.asarray(r_phy['mean']),
                       rtol=2e-3, atol=2e-3)
    assert np.allclose(np.asarray(z_phy_stat['lnvar']), np.asarray(r_phy['lnvar']),
                       rtol=2e-3, atol=2e-3)
    assert np.allclose(np.asarray(z_aux_stat['mean']), np.asarray(r_aux['mean']),
                       rtol=2e-3, atol=2e-3)
    assert np.allclose(np.asarray(z_aux_stat['lnvar']), np.asarray(r_aux['lnvar']),
                       rtol=2e-3, atol=2e-3)
    assert np.allclose(np.asarray(x_mean), np.asarray(r_x), rtol=2e-3, atol=2e-3)

    # inference (hard_z) path: eps inputs are dropped from the kernel entirely
    z_phy_stat_h, z_aux_stat_h, x_mean_h = fwd(slab, x, None, None, hard_z=True)
    jax.block_until_ready(x_mean_h)
    assert bool(jnp.all(jnp.isfinite(x_mean_h)))
    rh_phy, rh_aux, rh_x = reference_forward(flat_params, x, eps_phy, eps_aux, hard_z=True)
    assert np.allclose(np.asarray(x_mean_h), np.asarray(rh_x), rtol=2e-3, atol=2e-3)

    print("KERNEL_OK")
</pallas_src>

<mosaic_0001>
module attributes {stable_mosaic.version = 11 : i64} {
  func.func @_fused_phys_vae_kernel(%arg0: i32, %arg1: memref<8x11xf32, #tpu.memory_space<vmem>>, %arg2: memref<8x11xf32, #tpu.memory_space<vmem>>, %arg3: memref<528x128xf32, #tpu.memory_space<vmem>>, %arg4: memref<8x128xf32, #tpu.memory_space<vmem>>) attributes {dimension_semantics = [#tpu.dimension_semantics<parallel>], iteration_bounds = array<i64: 1>, scalar_prefetch = 0 : i64, scratch_operands = 0 : i64, tpu.core_type = #tpu.core_type<tc>, window_params = [{transform_indices = @transform_0, window_bounds = array<i64: 8, 11>}, {transform_indices = @transform_1, window_bounds = array<i64: 8, 11>}, {pipeline_mode = #tpu.pipeline_mode<synchronous>, transform_indices = @transform_2, window_bounds = array<i64: 528, 128>}, {transform_indices = @transform_3, window_bounds = array<i64: 8, 128>}]} {
    %c0 = arith.constant 0 : index
    %c0_0 = arith.constant 0 : index
    %0 = vector.load %arg1[%c0, %c0_0] : memref<8x11xf32, #tpu.memory_space<vmem>>, vector<8x11xf32>
    %c0_1 = arith.constant 0 : index
    %c0_2 = arith.constant 0 : index
    %1 = vector.load %arg3[%c0_1, %c0_2] : memref<528x128xf32, #tpu.memory_space<vmem>>, vector<11x32xf32>
    %cst = arith.constant dense<0.000000e+00> : vector<8x32xf32>
    %2 = tpu.matmul %0, %1, %cst {dimension_numbers = #tpu.dot_dimension_numbers<[1], [0], [0], [1], [0, 0, 1, 1], [], []>} : vector<8x11xf32>, vector<11x32xf32>, vector<8x32xf32> -> vector<8x32xf32>
    %c16 = arith.constant 16 : index
    %c0_3 = arith.constant 0 : index
    %3 = vector.load %arg3[%c16, %c0_3] : memref<528x128xf32, #tpu.memory_space<vmem>>, vector<1x32xf32>
    %4 = vector.broadcast %3 : vector<1x32xf32> to vector<8x32xf32>
    %5 = arith.addf %2, %4 : vector<8x32xf32>
    %cst_4 = arith.constant 0.000000e+00 : f32
    %6 = vector.broadcast %cst_4 : f32 to vector<8x32xf32>
    %7 = arith.maximumf %5, %6 : vector<8x32xf32>
    %c24 = arith.constant 24 : index
    %c0_5 = arith.constant 0 : index
    %8 = vector.load %arg3[%c24, %c0_5] : memref<528x128xf32, #tpu.memory_space<vmem>>, vector<32x32xf32>
    %cst_6 = arith.constant dense<0.000000e+00> : vector<8x32xf32>
    %9 = tpu.matmul %7, %8, %cst_6 {dimension_numbers = #tpu.dot_dimension_numbers<[1], [0], [0], [1], [0, 0, 1, 1], [], []>} : vector<8x32xf32>, vector<32x32xf32>, vector<8x32xf32> -> vector<8x32xf32>
    %c56 = arith.constant 56 : index
    %c0_7 = arith.constant 0 : index
    %10 = vector.load %arg3[%c56, %c0_7] : memref<528x128xf32, #tpu.memory_space<vmem>>, vector<1x32xf32>
    %11 = vector.broadcast %10 : vector<1x32xf32> to vector<8x32xf32>
    %12 = arith.addf %9, %11 : vector<8x32xf32>
    %cst_8 = arith.constant 0.000000e+00 : f32
    %13 = vector.broadcast %cst_8 : f32 to vector<8x32xf32>
    %14 = arith.maximumf %12, %13 : vector<8x32xf32>
    %c64 = arith.constant 64 : index
    %c0_9 = arith.constant 0 : index
    %15 = vector.load %arg3[%c64, %c0_9] : memref<528x128xf32, #tpu.memory_space<vmem>>, vector<32x32xf32>
    %cst_10 = arith.constant dense<0.000000e+00> : vector<8x32xf32>
    %16 = tpu.matmul %14, %15, %cst_10 {dimension_numbers = #tpu.dot_dimension_numbers<[1], [0], [0], [1], [0, 0, 1, 1], [], []>} : vector<8x32xf32>, vector<32x32xf32>, vector<8x32xf32> -> vector<8x32xf32>
    %c96 = arith.constant 96 : index
    %c0_11 = arith.constant 0 : index
    %17 = vector.load %arg3[%c96, %c0_11] : memref<528x128xf32, #tpu.memory_space<vmem>>, vector<1x32xf32>
    %18 = vector.broadcast %17 : vector<1x32xf32> to vector<8x32xf32>
    %19 = arith.addf %16, %18 : vector<8x32xf32>
    %c104 = arith.constant 104 : index
    %c0_12 = arith.constant 0 : index
    %20 = vector.load %arg3[%c104, %c0_12] : memref<528x128xf32, #tpu.memory_space<vmem>>, vector<32x48xf32>
    %cst_13 = arith.constant dense<0.000000e+00> : vector<8x48xf32>
    %21 = tpu.matmul %19, %20, %cst_13 {dimension_numbers = #tpu.dot_dimension_numbers<[1], [0], [0], [1], [0, 0, 1, 1], [], []>} : vector<8x32xf32>, vector<32x48xf32>, vector<8x48xf32> -> vector<8x48xf32>
    %c136 = arith.constant 136 : index
    %c0_14 = arith.constant 0 : index
    %22 = vector.load %arg3[%c136, %c0_14] : memref<528x128xf32, #tpu.memory_space<vmem>>, vector<1x48xf32>
    %23 = vector.broadcast %22 : vector<1x48xf32> to vector<8x48xf32>
    %24 = arith.addf %21, %23 : vector<8x48xf32>
    %cst_15 = arith.constant 0.000000e+00 : f32
    %25 = vector.broadcast %cst_15 : f32 to vector<8x48xf32>
    %26 = arith.maximumf %24, %25 : vector<8x48xf32>
    %c144 = arith.constant 144 : index
    %c0_16 = arith.constant 0 : index
    %27 = vector.load %arg3[%c144, %c0_16] : memref<528x128xf32, #tpu.memory_space<vmem>>, vector<48x19xf32>
    %cst_17 = arith.constant dense<0.000000e+00> : vector<8x19xf32>
    %28 = tpu.matmul %26, %27, %cst_17 {dimension_numbers = #tpu.dot_dimension_numbers<[1], [0], [0], [1], [0, 0, 1, 1], [], []>} : vector<8x48xf32>, vector<48x19xf32>, vector<8x19xf32> -> vector<8x19xf32>
    %c192 = arith.constant 192 : index
    %c0_18 = arith.constant 0 : index
    %29 = vector.load %arg3[%c192, %c0_18] : memref<528x128xf32, #tpu.memory_space<vmem>>, vector<1x19xf32>
    %30 = vector.broadcast %29 : vector<1x19xf32> to vector<8x19xf32>
    %31 = arith.addf %28, %30 : vector<8x19xf32>
    %32 = vector.extract_strided_slice %31 {offsets = [0, 0], sizes = [8, 4], strides = [1, 1]} : vector<8x19xf32> to vector<8x4xf32>
    %33 = vector.extract_strided_slice %31 {offsets = [0, 4], sizes = [8, 4], strides = [1, 1]} : vector<8x19xf32> to vector<8x4xf32>
    %34 = vector.extract_strided_slice %31 {offsets = [0, 8], sizes = [8, 11], strides = [1, 1]} : vector<8x19xf32> to vector<8x11xf32>
    %35 = math.tanh %34 : vector<8x11xf32>
    %36 = arith.mulf %0, %35 : vector<8x11xf32>
    %c0_19 = arith.constant 0 : index
    %c0_20 = arith.constant 0 : index
    %37 = vector.load %arg3[%c0_19, %c0_20] : memref<528x128xf32, #tpu.memory_space<vmem>>, vector<11x32xf32>
    %cst_21 = arith.constant dense<0.000000e+00> : vector<8x32xf32>
    %38 = tpu.matmul %36, %37, %cst_21 {dimension_numbers = #tpu.dot_dimension_numbers<[1], [0], [0], [1], [0, 0, 1, 1], [], []>} : vector<8x11xf32>, vector<11x32xf32>, vector<8x32xf32> -> vector<8x32xf32>
    %c16_22 = arith.constant 16 : index
    %c0_23 = arith.constant 0 : index
    %39 = vector.load %arg3[%c16_22, %c0_23] : memref<528x128xf32, #tpu.memory_space<vmem>>, vector<1x32xf32>
    %40 = vector.broadcast %39 : vector<1x32xf32> to vector<8x32xf32>
    %41 = arith.addf %38, %40 : vector<8x32xf32>
    %cst_24 = arith.constant 0.000000e+00 : f32
    %42 = vector.broadcast %cst_24 : f32 to vector<8x32xf32>
    %43 = arith.maximumf %41, %42 : vector<8x32xf32>
    %c24_25 = arith.constant 24 : index
    %c0_26 = arith.constant 0 : index
    %44 = vector.load %arg3[%c24_25, %c0_26] : memref<528x128xf32, #tpu.memory_space<vmem>>, vector<32x32xf32>
    %cst_27 = arith.constant dense<0.000000e+00> : vector<8x32xf32>
    %45 = tpu.matmul %43, %44, %cst_27 {dimension_numbers = #tpu.dot_dimension_numbers<[1], [0], [0], [1], [0, 0, 1, 1], [], []>} : vector<8x32xf32>, vector<32x32xf32>, vector<8x32xf32> -> vector<8x32xf32>
    %c56_28 = arith.constant 56 : index
    %c0_29 = arith.constant 0 : index
    %46 = vector.load %arg3[%c56_28, %c0_29] : memref<528x128xf32, #tpu.memory_space<vmem>>, vector<1x32xf32>
    %47 = vector.broadcast %46 : vector<1x32xf32> to vector<8x32xf32>
    %48 = arith.addf %45, %47 : vector<8x32xf32>
    %cst_30 = arith.constant 0.000000e+00 : f32
    %49 = vector.broadcast %cst_30 : f32 to vector<8x32xf32>
    %50 = arith.maximumf %48, %49 : vector<8x32xf32>
    %c64_31 = arith.constant 64 : index
    %c0_32 = arith.constant 0 : index
    %51 = vector.load %arg3[%c64_31, %c0_32] : memref<528x128xf32, #tpu.memory_space<vmem>>, vector<32x32xf32>
    %cst_33 = arith.constant dense<0.000000e+00> : vector<8x32xf32>
    %52 = tpu.matmul %50, %51, %cst_33 {dimension_numbers = #tpu.dot_dimension_numbers<[1], [0], [0], [1], [0, 0, 1, 1], [], []>} : vector<8x32xf32>, vector<32x32xf32>, vector<8x32xf32> -> vector<8x32xf32>
    %c96_34 = arith.constant 96 : index
    %c0_35 = arith.constant 0 : index
    %53 = vector.load %arg3[%c96_34, %c0_35] : memref<528x128xf32, #tpu.memory_space<vmem>>, vector<1x32xf32>
    %54 = vector.broadcast %53 : vector<1x32xf32> to vector<8x32xf32>
    %55 = arith.addf %52, %54 : vector<8x32xf32>
    %c200 = arith.constant 200 : index
    %c0_36 = arith.constant 0 : index
    %56 = vector.load %arg3[%c200, %c0_36] : memref<528x128xf32, #tpu.memory_space<vmem>>, vector<32x32xf32>
    %cst_37 = arith.constant dense<0.000000e+00> : vector<8x32xf32>
    %57 = tpu.matmul %55, %56, %cst_37 {dimension_numbers = #tpu.dot_dimension_numbers<[1], [0], [0], [1], [0, 0, 1, 1], [], []>} : vector<8x32xf32>, vector<32x32xf32>, vector<8x32xf32> -> vector<8x32xf32>
    %c232 = arith.constant 232 : index
    %c0_38 = arith.constant 0 : index
    %58 = vector.load %arg3[%c232, %c0_38] : memref<528x128xf32, #tpu.memory_space<vmem>>, vector<1x32xf32>
    %59 = vector.broadcast %58 : vector<1x32xf32> to vector<8x32xf32>
    %60 = arith.addf %57, %59 : vector<8x32xf32>
    %cst_39 = arith.constant 0.000000e+00 : f32
    %61 = vector.broadcast %cst_39 : f32 to vector<8x32xf32>
    %62 = arith.maximumf %60, %61 : vector<8x32xf32>
    %c240 = arith.constant 240 : index
    %c0_40 = arith.constant 0 : index
    %63 = vector.load %arg3[%c240, %c0_40] : memref<528x128xf32, #tpu.memory_space<vmem>>, vector<32x14xf32>
    %cst_41 = arith.constant dense<0.000000e+00> : vector<8x14xf32>
    %64 = tpu.matmul %62, %63, %cst_41 {dimension_numbers = #tpu.dot_dimension_numbers<[1], [0], [0], [1], [0, 0, 1, 1], [], []>} : vector<8x32xf32>, vector<32x14xf32>, vector<8x14xf32> -> vector<8x14xf32>
    %c272 = arith.constant 272 : index
    %c0_42 = arith.constant 0 : index
    %65 = vector.load %arg3[%c272, %c0_42] : memref<528x128xf32, #tpu.memory_space<vmem>>, vector<1x14xf32>
    %66 = vector.broadcast %65 : vector<1x14xf32> to vector<8x14xf32>
    %67 = arith.addf %64, %66 : vector<8x14xf32>
    %68 = vector.extract_strided_slice %67 {offsets = [0, 0], sizes = [8, 7], strides = [1, 1]} : vector<8x14xf32> to vector<8x7xf32>
    %cst_43 = arith.constant 2.000000e+01 : f32
    %69 = vector.broadcast %cst_43 : f32 to vector<8x7xf32>
    %70 = arith.cmpf ogt, %68, %69 : vector<8x7xf32>
    %cst_44 = arith.constant 2.000000e+01 : f32
    %71 = vector.broadcast %cst_44 : f32 to vector<8x7xf32>
    %72 = arith.minimumf %68, %71 : vector<8x7xf32>
    %73 = math.exp %72 : vector<8x7xf32>
    %74 = math.log1p %73 : vector<8x7xf32>
    %75 = arith.select %70, %68, %74 : vector<8x7xi1>, vector<8x7xf32>
    %76 = vector.extract_strided_slice %67 {offsets = [0, 7], sizes = [8, 7], strides = [1, 1]} : vector<8x14xf32> to vector<8x7xf32>
    %c0_45 = arith.constant 0 : index
    %c0_46 = arith.constant 0 : index
    %77 = vector.load %arg2[%c0_45, %c0_46] : memref<8x11xf32, #tpu.memory_space<vmem>>, vector<8x11xf32>
    %78 = vector.extract_strided_slice %77 {offsets = [0, 0], sizes = [8, 7], strides = [1, 1]} : vector<8x11xf32> to vector<8x7xf32>
    %79 = vector.extract_strided_slice %77 {offsets = [0, 7], sizes = [8, 4], strides = [1, 1]} : vector<8x11xf32> to vector<8x4xf32>
    %cst_47 = arith.constant 5.000000e-01 : f32
    %80 = vector.broadcast %cst_47 : f32 to vector<8x7xf32>
    %81 = arith.mulf %80, %76 : vector<8x7xf32>
    %82 = math.exp %81 : vector<8x7xf32>
    %83 = arith.mulf %82, %78 : vector<8x7xf32>
    %84 = arith.addf %75, %83 : vector<8x7xf32>
    %cst_48 = arith.constant 0.000000e+00 : f32
    %cst_49 = arith.constant 1.000000e+00 : f32
    %85 = vector.broadcast %cst_48 : f32 to vector<8x7xf32>
    %86 = arith.maximumf %85, %84 : vector<8x7xf32>
    %87 = vector.broadcast %cst_49 : f32 to vector<8x7xf32>
    %88 = arith.minimumf %87, %86 : vector<8x7xf32>
    %cst_50 = arith.constant 5.000000e-01 : f32
    %89 = vector.broadcast %cst_50 : f32 to vector<8x4xf32>
    %90 = arith.mulf %89, %33 : vector<8x4xf32>
    %91 = math.exp %90 : vector<8x4xf32>
    %92 = arith.mulf %91, %79 : vector<8x4xf32>
    %93 = arith.addf %32, %92 : vector<8x4xf32>
    %94 = vector.extract_strided_slice %88 {offsets = [0, 6], sizes = [8, 1], strides = [1, 1]} : vector<8x7xf32> to vector<8x1xf32>
    %cst_51 = arith.constant 0.899999976 : f32
    %95 = vector.broadcast %cst_51 : f32 to vector<8x1xf32>
    %96 = arith.mulf %94, %95 : vector<8x1xf32>
    %cst_52 = arith.constant 1.000000e-01 : f32
    %97 = vector.broadcast %cst_52 : f32 to vector<8x1xf32>
    %98 = arith.addf %96, %97 : vector<8x1xf32>
    %cst_53 = arith.constant 9.99999997E-7 : f32
    %99 = vector.broadcast %cst_53 : f32 to vector<8x1xf32>
    %100 = arith.maximumf %98, %99 : vector<8x1xf32>
    %101 = math.log %100 : vector<8x1xf32>
    %cst_54 = arith.constant 5.000000e-01 : f32
    %102 = vector.broadcast %cst_54 : f32 to vector<8x1xf32>
    %103 = arith.mulf %102, %101 : vector<8x1xf32>
    %cst_55 = arith.constant 1.61864841 : f32
    %104 = vector.broadcast %cst_55 : f32 to vector<8x1xf32>
    %105 = arith.addf %103, %104 : vector<8x1xf32>
    %106 = math.exp %105 : vector<8x1xf32>
    %cst_56 = arith.constant 2.535000e-01 : f32
    %107 = vector.broadcast %cst_56 : f32 to vector<8x1xf32>
    %108 = arith.mulf %107, %101 : vector<8x1xf32>
    %cst_57 = arith.constant 2.93765473 : f32
    %109 = vector.broadcast %cst_57 : f32 to vector<8x1xf32>
    %110 = arith.addf %108, %109 : vector<8x1xf32>
    %111 = math.exp %110 : vector<8x1xf32>
    %c280 = arith.constant 280 : index
    %c0_58 = arith.constant 0 : index
    %112 = vector.load %arg3[%c280, %c0_58] : memref<528x128xf32, #tpu.memory_space<vmem>>, vector<7x11xf32>
    %cst_59 = arith.constant dense<0.000000e+00> : vector<8x11xf32>
    %113 = tpu.matmul %88, %112, %cst_59 {dimension_numbers = #tpu.dot_dimension_numbers<[1], [0], [0], [1], [0, 0, 1, 1], [], []>} : vector<8x7xf32>, vector<7x11xf32>, vector<8x11xf32> -> vector<8x11xf32>
    %c288 = arith.constant 288 : index
    %c0_60 = arith.constant 0 : index
    %114 = vector.load %arg3[%c288, %c0_60] : memref<528x128xf32, #tpu.memory_space<vmem>>, vector<1x11xf32>
    %115 = vector.broadcast %106 : vector<8x1xf32> to vector<8x11xf32>
    %116 = vector.broadcast %114 : vector<1x11xf32> to vector<8x11xf32>
    %117 = arith.mulf %115, %116 : vector<8x11xf32>
    %118 = arith.addf %113, %117 : vector<8x11xf32>
    %c289 = arith.constant 289 : index
    %c0_61 = arith.constant 0 : index
    %119 = vector.load %arg3[%c289, %c0_61] : memref<528x128xf32, #tpu.memory_space<vmem>>, vector<1x11xf32>
    %120 = vector.broadcast %111 : vector<8x1xf32> to vector<8x11xf32>
    %121 = vector.broadcast %119 : vector<1x11xf32> to vector<8x11xf32>
    %122 = arith.mulf %120, %121 : vector<8x11xf32>
    %123 = arith.addf %118, %122 : vector<8x11xf32>
    %c290 = arith.constant 290 : index
    %c0_62 = arith.constant 0 : index
    %124 = vector.load %arg3[%c290, %c0_62] : memref<528x128xf32, #tpu.memory_space<vmem>>, vector<1x11xf32>
    %125 = vector.broadcast %124 : vector<1x11xf32> to vector<8x11xf32>
    %126 = arith.addf %123, %125 : vector<8x11xf32>
    %c296 = arith.constant 296 : index
    %c0_63 = arith.constant 0 : index
    %127 = vector.load %arg3[%c296, %c0_63] : memref<528x128xf32, #tpu.memory_space<vmem>>, vector<7x32xf32>
    %cst_64 = arith.constant dense<0.000000e+00> : vector<8x32xf32>
    %128 = tpu.matmul %88, %127, %cst_64 {dimension_numbers = #tpu.dot_dimension_numbers<[1], [0], [0], [1], [0, 0, 1, 1], [], []>} : vector<8x7xf32>, vector<7x32xf32>, vector<8x32xf32> -> vector<8x32xf32>
    %c304 = arith.constant 304 : index
    %c0_65 = arith.constant 0 : index
    %129 = vector.load %arg3[%c304, %c0_65] : memref<528x128xf32, #tpu.memory_space<vmem>>, vector<4x32xf32>
    %cst_66 = arith.constant dense<0.000000e+00> : vector<8x32xf32>
    %130 = tpu.matmul %93, %129, %cst_66 {dimension_numbers = #tpu.dot_dimension_numbers<[1], [0], [0], [1], [0, 0, 1, 1], [], []>} : vector<8x4xf32>, vector<4x32xf32>, vector<8x32xf32> -> vector<8x32xf32>
    %131 = arith.addf %128, %130 : vector<8x32xf32>
    %c312 = arith.constant 312 : index
    %c0_67 = arith.constant 0 : index
    %132 = vector.load %arg3[%c312, %c0_67] : memref<528x128xf32, #tpu.memory_space<vmem>>, vector<1x32xf32>
    %133 = vector.broadcast %132 : vector<1x32xf32> to vector<8x32xf32>
    %134 = arith.addf %131, %133 : vector<8x32xf32>
    %cst_68 = arith.constant 0.000000e+00 : f32
    %135 = vector.broadcast %cst_68 : f32 to vector<8x32xf32>
    %136 = arith.maximumf %134, %135 : vector<8x32xf32>
    %c320 = arith.constant 320 : index
    %c0_69 = arith.constant 0 : index
    %137 = vector.load %arg3[%c320, %c0_69] : memref<528x128xf32, #tpu.memory_space<vmem>>, vector<32x64xf32>
    %cst_70 = arith.constant dense<0.000000e+00> : vector<8x64xf32>
    %138 = tpu.matmul %136, %137, %cst_70 {dimension_numbers = #tpu.dot_dimension_numbers<[1], [0], [0], [1], [0, 0, 1, 1], [], []>} : vector<8x32xf32>, vector<32x64xf32>, vector<8x64xf32> -> vector<8x64xf32>
    %c352 = arith.constant 352 : index
    %c0_71 = arith.constant 0 : index
    %139 = vector.load %arg3[%c352, %c0_71] : memref<528x128xf32, #tpu.memory_space<vmem>>, vector<1x64xf32>
    %140 = vector.broadcast %139 : vector<1x64xf32> to vector<8x64xf32>
    %141 = arith.addf %138, %140 : vector<8x64xf32>
    %cst_72 = arith.constant 0.000000e+00 : f32
    %142 = vector.broadcast %cst_72 : f32 to vector<8x64xf32>
    %143 = arith.maximumf %141, %142 : vector<8x64xf32>
    %c360 = arith.constant 360 : index
    %c0_73 = arith.constant 0 : index
    %144 = vector.load %arg3[%c360, %c0_73] : memref<528x128xf32, #tpu.memory_space<vmem>>, vector<64x11xf32>
    %cst_74 = arith.constant dense<0.000000e+00> : vector<8x11xf32>
    %145 = tpu.matmul %143, %144, %cst_74 {dimension_numbers = #tpu.dot_dimension_numbers<[1], [0], [0], [1], [0, 0, 1, 1], [], []>} : vector<8x64xf32>, vector<64x11xf32>, vector<8x11xf32> -> vector<8x11xf32>
    %c424 = arith.constant 424 : index
    %c0_75 = arith.constant 0 : index
    %146 = vector.load %arg3[%c424, %c0_75] : memref<528x128xf32, #tpu.memory_space<vmem>>, vector<1x11xf32>
    %147 = vector.broadcast %146 : vector<1x11xf32> to vector<8x11xf32>
    %148 = arith.addf %145, %147 : vector<8x11xf32>
    %c432 = arith.constant 432 : index
    %c0_76 = arith.constant 0 : index
    %149 = vector.load %arg3[%c432, %c0_76] : memref<528x128xf32, #tpu.memory_space<vmem>>, vector<11x44xf32>
    %cst_77 = arith.constant dense<0.000000e+00> : vector<8x44xf32>
    %150 = tpu.matmul %126, %149, %cst_77 {dimension_numbers = #tpu.dot_dimension_numbers<[1], [0], [0], [1], [0, 0, 1, 1], [], []>} : vector<8x11xf32>, vector<11x44xf32>, vector<8x44xf32> -> vector<8x44xf32>
    %c448 = arith.constant 448 : index
    %c0_78 = arith.constant 0 : index
    %151 = vector.load %arg3[%c448, %c0_78] : memref<528x128xf32, #tpu.memory_space<vmem>>, vector<11x44xf32>
    %cst_79 = arith.constant dense<0.000000e+00> : vector<8x44xf32>
    %152 = tpu.matmul %148, %151, %cst_79 {dimension_numbers = #tpu.dot_dimension_numbers<[1], [0], [0], [1], [0, 0, 1, 1], [], []>} : vector<8x11xf32>, vector<11x44xf32>, vector<8x44xf32> -> vector<8x44xf32>
    %153 = arith.addf %150, %152 : vector<8x44xf32>
    %c464 = arith.constant 464 : index
    %c0_80 = arith.constant 0 : index
    %154 = vector.load %arg3[%c464, %c0_80] : memref<528x128xf32, #tpu.memory_space<vmem>>, vector<1x44xf32>
    %155 = vector.broadcast %154 : vector<1x44xf32> to vector<8x44xf32>
    %156 = arith.addf %153, %155 : vector<8x44xf32>
    %cst_81 = arith.constant 0.000000e+00 : f32
    %157 = vector.broadcast %cst_81 : f32 to vector<8x44xf32>
    %158 = arith.maximumf %156, %157 : vector<8x44xf32>
    %c472 = arith.constant 472 : index
    %c0_82 = arith.constant 0 : index
    %159 = vector.load %arg3[%c472, %c0_82] : memref<528x128xf32, #tpu.memory_space<vmem>>, vector<44x11xf32>
    %cst_83 = arith.constant dense<0.000000e+00> : vector<8x11xf32>
    %160 = tpu.matmul %158, %159, %cst_83 {dimension_numbers = #tpu.dot_dimension_numbers<[1], [0], [0], [1], [0, 0, 1, 1], [], []>} : vector<8x44xf32>, vector<44x11xf32>, vector<8x11xf32> -> vector<8x11xf32>
    %c520 = arith.constant 520 : index
    %c0_84 = arith.constant 0 : index
    %161 = vector.load %arg3[%c520, %c0_84] : memref<528x128xf32, #tpu.memory_space<vmem>>, vector<1x11xf32>
    %162 = vector.broadcast %161 : vector<1x11xf32> to vector<8x11xf32>
    %163 = arith.addf %160, %162 : vector<8x11xf32>
    %cst_85 = arith.constant 0.000000e+00 : f32
    %164 = vector.broadcast %cst_85 : f32 to vector<8x95xf32>
    %165 = tpu.concatenate %75, %76, %32, %33, %163, %164 in 1 : vector<8x7xf32>, vector<8x7xf32>, vector<8x4xf32>, vector<8x4xf32>, vector<8x11xf32>, vector<8x95xf32> -> vector<8x128xf32>
    %c0_86 = arith.constant 0 : index
    %c0_87 = arith.constant 0 : index
    %166 = vector.load %arg4[%c0_86, %c0_87] : memref<8x128xf32, #tpu.memory_space<vmem>>, vector<8x128xf32>
    tpu.vector_store %arg4[%c0_86, %c0_87], %165 {strides = array<i32>} : memref<8x128xf32, #tpu.memory_space<vmem>>, vector<8x128xf32>,
    return
  }
  func.func @transform_0(%arg0: i32) -> (i32, i32) {
    %c0_i32 = arith.constant 0 : i32
    %c0_i32_0 = arith.constant 0 : i32
    return %arg0, %c0_i32 : i32, i32
  }
  func.func @transform_1(%arg0: i32) -> (i32, i32) {
    %c0_i32 = arith.constant 0 : i32
    %c0_i32_0 = arith.constant 0 : i32
    return %arg0, %c0_i32 : i32, i32
  }
  func.func @transform_2(%arg0: i32) -> (i32, i32) {
    %c0_i32 = arith.constant 0 : i32
    %c0_i32_0 = arith.constant 0 : i32
    %c0_i32_1 = arith.constant 0 : i32
    return %c0_i32, %c0_i32_0 : i32, i32
  }
  func.func @transform_3(%arg0: i32) -> (i32, i32) {
    %c0_i32 = arith.constant 0 : i32
    %c0_i32_0 = arith.constant 0 : i32
    return %arg0, %c0_i32 : i32, i32
  }
}

</mosaic_0001>

<llo_original>
// kernel: phys_vae_forward.1
$region0: #{phys_vae_forward.1}
  #allocation0 [shape = 'u32[]', space=smem, size = 0x4, offset = 0x4, fixed_abs, tag = 'smem constant byte address 0x4 - core index']
  #allocation1 [shape = 'u32[144,128]{1,0:T(1,128)}', space=vmem, size = 0x12000, scoped, tag = 'internal scratch']
  %s0 = inlined_call_operand.vmem [shape: f32[8,11], index: 0, kind: input, shape index: {}]
  %s1 = inlined_call_operand.vmem [shape: f32[8,11], index: 1, kind: input, shape index: {}]
  %s2 = inlined_call_operand.hbm [shape: f32[528,128], index: 2, kind: input, shape index: {}]
  %s3 = inlined_call_operand.vmem [shape: f32[8,128], index: 3, kind: output, shape index: {}]
  %s4 = sld [smem:[#allocation0]]
  $region26: #{phys_vae_forward.1} parent=0
    _
  %s6 = ssub.s32 1, %s4
  %s7 = scalar_select 0, %s6, %s4
  $region1: #{phys_vae_forward.1} parent=0
    #allocation2 [shape = 'u8[270336]{0}', space=vmem, size = 0x42000, scoped, tag = 'input window, operand 2, single buffered']
    #allocation3 [shape = 's32[1]{0}', space=sflag, size = 0x4, scoped, tag = 'scoped memory for phys_vae_forward.1']
    %8 = vsyncpa [#allocation3], 0
    // Predicated region
    $region2: #{phys_vae_forward.1} parent=1 // pred_check
      _
    $region3: #{phys_vae_forward.1} parent=1 // pred_check_branch
      %10 = sbr.rel (0) target = $region5
    $region4: #{phys_vae_forward.1} parent=1 // pred_region
      _
    $region5: #{phys_vae_forward.1} parent=1 // pred_fallthru
      _
    // Predicated region
    $region6: #{phys_vae_forward.1} parent=1 // pred_check
      _
    $region7: #{phys_vae_forward.1} parent=1 // pred_check_branch
      %12 = sbr.rel (0) target = $region9
    $region8: #{phys_vae_forward.1} parent=1 // pred_region
      _
    $region9: #{phys_vae_forward.1} parent=1 // pred_fallthru
      _
    // Predicated region
    $region10: #{phys_vae_forward.1} parent=1 // pred_check
      _
    $region11: #{phys_vae_forward.1} parent=1 // pred_check_branch
      %14 = sbr.rel (0) target = $region13
    $region12: #{phys_vae_forward.1} parent=1 // pred_region
      %s16 = ssub.s32 8448, 8448
      %17 = vsyncadd [#allocation3], %s16
      %s18 = sshll.u32 [#allocation2], 4
      %s19 = int_to_ptr.vmem [resolvable:$true] %s18
      %24 = dma.hbm_to_vmem [thread:$0]  %s2, 8448, %s19, [#allocation3], 128, 128, 8
    $region13: #{phys_vae_forward.1} parent=1 // pred_fallthru
      _
    // Predicated region
    $region14: #{phys_vae_forward.1} parent=1 // pred_check
      _
    $region15: #{phys_vae_forward.1} parent=1 // pred_check_branch
      %26 = sbr.rel (0) target = $region17
    $region16: #{phys_vae_forward.1} parent=1 // pred_region
      %27 = dma.done [#allocation3], 8448
    $region17: #{phys_vae_forward.1} parent=1 // pred_fallthru
      _
    %v28 = vld [vmem:[%s0] sm:$0xff]
    %v29 = vld [vmem:[#allocation2] sm:$0xff]
    %v30 = vld [vmem:[#allocation2 + $0x8] sm:$0x7]
    %v31 = vld [vmem:[#allocation2 + $0x10] sm:$0x1]
    %v32 = vlaneseq
    %v33 = vshrl.u32 %v32, 7
    %v34 = vsub.s32 0, %v33
    %v35 = vrot.slane %v31, %v34
    %vm36 = vcmask 89088
    %v38 = vsel %vm36, %v28, 0
    %vm40 = vcmask 1042432
    %v42 = vsel %vm40, %v30, 0
    %44 = vmatprep.subr.mxu0 0.0
    %45 = vmatpush1.msra.mxu0 %v29
    %46 = vmatprep.subr.mxu0 0.0
    %47 = vmatpush1.msra.mxu0 %v42
    %48 = vmatprep.subr.mxu0 0.0
    %49 = vmatpush1.msra.mxu0 0.0
    %50 = vmatprep.subr.mxu0 0.0
    %51 = vmatpush1.msra.mxu0 0.0
    %52 = vmatprep.subr.mxu0 0.0
    %53 = vmatpush1.msra.mxu0 0.0
    %54 = vmatprep.subr.mxu0 0.0
    %55 = vmatpush1.msra.mxu0 0.0
    %56 = vmatprep.subr.mxu0 0.0
    %57 = vmatpush1.msra.mxu0 0.0
    %58 = vmatprep.subr.mxu0 0.0
    %59 = vmatpush1.msra.mxu0 0.0
    %60 = vmatprep.subr.mxu0 0.0
    %61 = vmatpush1.msra.mxu0 0.0
    %62 = vmatprep.subr.mxu0 0.0
    %63 = vmatpush1.msra.mxu0 0.0
    %64 = vmatprep.subr.mxu0 0.0
    %65 = vmatpush1.msra.mxu0 0.0
    %66 = vmatprep.subr.mxu0 0.0
    %67 = vmatpush1.msra.mxu0 0.0
    %68 = vmatprep.subr.mxu0 0.0
    %69 = vmatpush1.msra.mxu0 0.0
    %70 = vmatprep.subr.mxu0 0.0
    %71 = vmatpush1.msra.mxu0 0.0
    %72 = vmatprep.subr.mxu0 0.0
    %73 = vmatpush1.msra.mxu0 0.0
    %74 = vmatprep.subr.mxu0 0.0
    %75 = vmatpush1.msra.mxu0 0.0
    %76 = vmatprep.subr.mxu0 0.0
    %77 = vmatpush1.msra.mxu0 0.0
    %78 = vmatprep.subr.mxu0 0.0
    %79 = vmatpush1.msra.mxu0 0.0
    %80 = vmatprep.subr.mxu0 0.0
    %81 = vmatpush1.msra.mxu0 0.0
    %82 = vmatprep.subr.mxu0 0.0
    %83 = vmatpush1.msra.mxu0 0.0
    %84 = vmatprep.subr.mxu0 0.0
    %85 = vmatpush1.msra.mxu0 0.0
    %86 = vmatprep.subr.mxu0 0.0
    %87 = vmatpush1.msra.mxu0 0.0
    %88 = vmatprep.subr.mxu0 0.0
    %89 = vmatpush1.msra.mxu0 0.0
    %90 = vmatprep.subr.mxu0 0.0
    %91 = vmatpush1.msra.mxu0 0.0
    %92 = vmatprep.subr.mxu0 0.0
    %93 = vmatpush1.msra.mxu0 0.0
    %94 = vmatprep.subr.mxu0 0.0
    %95 = vmatpush1.msra.mxu0 0.0
    %96 = vmatprep.subr.mxu0 0.0
    %97 = vmatpush1.msra.mxu0 0.0
    %98 = vmatprep.subr.mxu0 0.0
    %99 = vmatpush1.msra.mxu0 0.0
    %100 = vmatprep.subr.mxu0 0.0
    %101 = vmatpush1.msra.mxu0 0.0
    %102 = vmatprep.subr.mxu0 0.0
    %103 = vmatpush1.msra.mxu0 0.0
    %104 = vmatprep.subr.mxu0 0.0
    %105 = vmatpush1.msra.mxu0 0.0
    %106 = vmatprep.subr.mxu0 0.0
    %107 = vmatpush1.msra.mxu0 0.0
    %108 = vmatprep.mubr.f32.mxu0 0.0
    %109 = vmatmul.mubr.f32.gmra.mrb[0].mxu0 %v38
    %v110 = vpop.f32.mrb[0].mxu0
    %v111 = vadd.f32 %v35, %v110
    %v112 = vpop.f32.mrb[0].mxu0
    %113 = vdwg.mxu0
    %v114 = vmax.f32 %v111, 0.0
    %v115 = vld [vmem:[#allocation2 + $0x18] sm:$0xff]
    %v116 = vld [vmem:[#allocation2 + $0x20] sm:$0xff]
    %v117 = vld [vmem:[#allocation2 + $0x28] sm:$0xff]
    %v118 = vld [vmem:[#allocation2 + $0x30] sm:$0xff]
    %v119 = vld [vmem:[#allocation2 + $0x38] sm:$0x1]
    %v120 = vlaneseq
    %v121 = vshrl.u32 %v120, 7
    %v122 = vsub.s32 0, %v121
    %v123 = vrot.slane %v119, %v122
    %vm124 = vcmask 261120
    %v126 = vsel %vm124, %v114, 0
    %128 = vmatprep.subr.mxu0 0.0
    %129 = vmatpush1.msra.mxu0 %v115
    %130 = vmatprep.subr.mxu0 0.0
    %131 = vmatpush1.msra.mxu0 %v116
    %132 = vmatprep.subr.mxu0 0.0
    %133 = vmatpush1.msra.mxu0 %v117
    %134 = vmatprep.subr.mxu0 0.0
    %135 = vmatpush1.msra.mxu0 %v118
    %136 = vmatprep.subr.mxu0 0.0
    %137 = vmatpush1.msra.mxu0 0.0
    %138 = vmatprep.subr.mxu0 0.0
    %139 = vmatpush1.msra.mxu0 0.0
    %140 = vmatprep.subr.mxu0 0.0
    %141 = vmatpush1.msra.mxu0 0.0
    %142 = vmatprep.subr.mxu0 0.0
    %143 = vmatpush1.msra.mxu0 0.0
    %144 = vmatprep.subr.mxu0 0.0
    %145 = vmatpush1.msra.mxu0 0.0
    %146 = vmatprep.subr.mxu0 0.0
    %147 = vmatpush1.msra.mxu0 0.0
    %148 = vmatprep.subr.mxu0 0.0
    %149 = vmatpush1.msra.mxu0 0.0
    %150 = vmatprep.subr.mxu0 0.0
    %151 = vmatpush1.msra.mxu0 0.0
    %152 = vmatprep.subr.mxu0 0.0
    %153 = vmatpush1.msra.mxu0 0.0
    %154 = vmatprep.subr.mxu0 0.0
    %155 = vmatpush1.msra.mxu0 0.0
    %156 = vmatprep.subr.mxu0 0.0
    %157 = vmatpush1.msra.mxu0 0.0
    %158 = vmatprep.subr.mxu0 0.0
    %159 = vmatpush1.msra.mxu0 0.0
    %160 = vmatprep.subr.mxu0 0.0
    %161 = vmatpush1.msra.mxu0 0.0
    %162 = vmatprep.subr.mxu0 0.0
    %163 = vmatpush1.msra.mxu0 0.0
    %164 = vmatprep.subr.mxu0 0.0
    %165 = vmatpush1.msra.mxu0 0.0
    %166 = vmatprep.subr.mxu0 0.0
    %167 = vmatpush1.msra.mxu0 0.0
    %168 = vmatprep.subr.mxu0 0.0
    %169 = vmatpush1.msra.mxu0 0.0
    %170 = vmatprep.subr.mxu0 0.0
    %171 = vmatpush1.msra.mxu0 0.0
    %172 = vmatprep.subr.mxu0 0.0
    %173 = vmatpush1.msra.mxu0 0.0
    %174 = vmatprep.subr.mxu0 0.0
    %175 = vmatpush1.msra.mxu0 0.0
    %176 = vmatprep.subr.mxu0 0.0
    %177 = vmatpush1.msra.mxu0 0.0
    %178 = vmatprep.subr.mxu0 0.0
    %179 = vmatpush1.msra.mxu0 0.0
    %180 = vmatprep.subr.mxu0 0.0
    %181 = vmatpush1.msra.mxu0 0.0
    %182 = vmatprep.subr.mxu0 0.0
    %183 = vmatpush1.msra.mxu0 0.0
    %184 = vmatprep.subr.mxu0 0.0
    %185 = vmatpush1.msra.mxu0 0.0
    %186 = vmatprep.subr.mxu0 0.0
    %187 = vmatpush1.msra.mxu0 0.0
    %188 = vmatprep.subr.mxu0 0.0
    %189 = vmatpush1.msra.mxu0 0.0
    %190 = vmatprep.subr.mxu0 0.0
    %191 = vmatpush1.msra.mxu0 0.0
    %192 = vmatprep.mubr.f32.mxu0 0.0
    %193 = vmatmul.mubr.f32.gmra.mrb[0].mxu0 %v126
    %v194 = vpop.f32.mrb[0].mxu0
    %v195 = vadd.f32 %v123, %v194
    %v196 = vpop.f32.mrb[0].mxu0
    %197 = vdwg.mxu0
    %v198 = vmax.f32 %v195, 0.0
    %v199 = vld [vmem:[#allocation2 + $0x40] sm:$0xff]
    %v200 = vld [vmem:[#allocation2 + $0x48] sm:$0xff]
    %v201 = vld [vmem:[#allocation2 + $0x50] sm:$0xff]
    %v202 = vld [vmem:[#allocation2 + $0x58] sm:$0xff]
    %v203 = vld [vmem:[#allocation2 + $0x60] sm:$0x1]
    %v204 = vlaneseq
    %v205 = vshrl.u32 %v204, 7
    %v206 = vsub.s32 0, %v205
    %v207 = vrot.slane %v203, %v206
    %v209 = vsel %vm124, %v198, 0
    %211 = vmatprep.subr.mxu0 0.0
    %212 = vmatpush1.msra.mxu0 %v199
    %213 = vmatprep.subr.mxu0 0.0
    %214 = vmatpush1.msra.mxu0 %v200
    %215 = vmatprep.subr.mxu0 0.0
    %216 = vmatpush1.msra.mxu0 %v201
    %217 = vmatprep.subr.mxu0 0.0
    %218 = vmatpush1.msra.mxu0 %v202
    %219 = vmatprep.subr.mxu0 0.0
    %220 = vmatpush1.msra.mxu0 0.0
    %221 = vmatprep.subr.mxu0 0.0
    %222 = vmatpush1.msra.mxu0 0.0
    %223 = vmatprep.subr.mxu0 0.0
    %224 = vmatpush1.msra.mxu0 0.0
    %225 = vmatprep.subr.mxu0 0.0
    %226 = vmatpush1.msra.mxu0 0.0
    %227 = vmatprep.subr.mxu0 0.0
    %228 = vmatpush1.msra.mxu0 0.0
    %229 = vmatprep.subr.mxu0 0.0
    %230 = vmatpush1.msra.mxu0 0.0
    %231 = vmatprep.subr.mxu0 0.0
    %232 = vmatpush1.msra.mxu0 0.0
    %233 = vmatprep.subr.mxu0 0.0
    %234 = vmatpush1.msra.mxu0 0.0
    %235 = vmatprep.subr.mxu0 0.0
    %236 = vmatpush1.msra.mxu0 0.0
    %237 = vmatprep.subr.mxu0 0.0
    %238 = vmatpush1.msra.mxu0 0.0
    %239 = vmatprep.subr.mxu0 0.0
    %240 = vmatpush1.msra.mxu0 0.0
    %241 = vmatprep.subr.mxu0 0.0
    %242 = vmatpush1.msra.mxu0 0.0
    %243 = vmatprep.subr.mxu0 0.0
    %244 = vmatpush1.msra.mxu0 0.0
    %245 = vmatprep.subr.mxu0 0.0
    %246 = vmatpush1.msra.mxu0 0.0
    %247 = vmatprep.subr.mxu0 0.0
    %248 = vmatpush1.msra.mxu0 0.0
    %249 = vmatprep.subr.mxu0 0.0
    %250 = vmatpush1.msra.mxu0 0.0
    %251 = vmatprep.subr.mxu0 0.0
    %252 = vmatpush1.msra.mxu0 0.0
    %253 = vmatprep.subr.mxu0 0.0
    %254 = vmatpush1.msra.mxu0 0.0
    %255 = vmatprep.subr.mxu0 0.0
    %256 = vmatpush1.msra.mxu0 0.0
    %257 = vmatprep.subr.mxu0 0.0
    %258 = vmatpush1.msra.mxu0 0.0
    %259 = vmatprep.subr.mxu0 0.0
    %260 = vmatpush1.msra.mxu0 0.0
    %261 = vmatprep.subr.mxu0 0.0
    %262 = vmatpush1.msra.mxu0 0.0
    %263 = vmatprep.subr.mxu0 0.0
    %264 = vmatpush1.msra.mxu0 0.0
    %265 = vmatprep.subr.mxu0 0.0
    %266 = vmatpush1.msra.mxu0 0.0
    %267 = vmatprep.subr.mxu0 0.0
    %268 = vmatpush1.msra.mxu0 0.0
    %269 = vmatprep.subr.mxu0 0.0
    %270 = vmatpush1.msra.mxu0 0.0
    %271 = vmatprep.subr.mxu0 0.0
    %272 = vmatpush1.msra.mxu0 0.0
    %273 = vmatprep.subr.mxu0 0.0
    %274 = vmatpush1.msra.mxu0 0.0
    %275 = vmatprep.mubr.f32.mxu0 0.0
    %276 = vmatmul.mubr.f32.gmra.mrb[0].mxu0 %v209
    %v277 = vpop.f32.mrb[0].mxu0
    %v278 = vadd.f32 %v207, %v277
    %v279 = vpop.f32.mrb[0].mxu0
    %280 = vdwg.mxu0
    %v281 = vld [vmem:[#allocation2 + $0x68] sm:$0xff]
    %v282 = vld [vmem:[#allocation2 + $0x70] sm:$0xff]
    %v283 = vld [vmem:[#allocation2 + $0x78] sm:$0xff]
    %v284 = vld [vmem:[#allocation2 + $0x80] sm:$0xff]
    %v285 = vld [vmem:[#allocation2 + $0x88] sm:$0x1]
    %v286 = vlaneseq
    %v287 = vshrl.u32 %v286, 7
    %v288 = vsub.s32 0, %v287
    %v289 = vrot.slane %v285, %v288
    %v291 = vsel %vm124, %v278, 0
    %293 = vmatprep.subr.mxu0 0.0
    %294 = vmatpush1.msra.mxu0 %v281
    %295 = vmatprep.subr.mxu0 0.0
    %296 = vmatpush1.msra.mxu0 %v282
    %297 = vmatprep.subr.mxu0 0.0
    %298 = vmatpush1.msra.mxu0 %v283
    %299 = vmatprep.subr.mxu0 0.0
    %300 = vmatpush1.msra.mxu0 %v284
    %301 = vmatprep.subr.mxu0 0.0
    %302 = vmatpush1.msra.mxu0 0.0
    %303 = vmatprep.subr.mxu0 0.0
    %304 = vmatpush1.msra.mxu0 0.0
    %305 = vmatprep.subr.mxu0 0.0
    %306 = vmatpush1.msra.mxu0 0.0
    %307 = vmatprep.subr.mxu0 0.0
    %308 = vmatpush1.msra.mxu0 0.0
    %309 = vmatprep.subr.mxu0 0.0
    %310 = vmatpush1.msra.mxu0 0.0
    %311 = vmatprep.subr.mxu0 0.0
    %312 = vmatpush1.msra.mxu0 0.0
    %313 = vmatprep.subr.mxu0 0.0
    %314 = vmatpush1.msra.mxu0 0.0
    %315 = vmatprep.subr.mxu0 0.0
    %316 = vmatpush1.msra.mxu0 0.0
    %317 = vmatprep.subr.mxu0 0.0
    %318 = vmatpush1.msra.mxu0 0.0
    %319 = vmatprep.subr.mxu0 0.0
    %320 = vmatpush1.msra.mxu0 0.0
    %321 = vmatprep.subr.mxu0 0.0
    %322 = vmatpush1.msra.mxu0 0.0
    %323 = vmatprep.subr.mxu0 0.0
    %324 = vmatpush1.msra.mxu0 0.0
    %325 = vmatprep.subr.mxu0 0.0
    %326 = vmatpush1.msra.mxu0 0.0
    %327 = vmatprep.subr.mxu0 0.0
    %328 = vmatpush1.msra.mxu0 0.0
    %329 = vmatprep.subr.mxu0 0.0
    %330 = vmatpush1.msra.mxu0 0.0
    %331 = vmatprep.subr.mxu0 0.0
    %332 = vmatpush1.msra.mxu0 0.0
    %333 = vmatprep.subr.mxu0 0.0
    %334 = vmatpush1.msra.mxu0 0.0
    %335 = vmatprep.subr.mxu0 0.0
    %336 = vmatpush1.msra.mxu0 0.0
    %337 = vmatprep.subr.mxu0 0.0
    %338 = vmatpush1.msra.mxu0 0.0
    %339 = vmatprep.subr.mxu0 0.0
    %340 = vmatpush1.msra.mxu0 0.0
    %341 = vmatprep.subr.mxu0 0.0
    %342 = vmatpush1.msra.mxu0 0.0
    %343 = vmatprep.subr.mxu0 0.0
    %344 = vmatpush1.msra.mxu0 0.0
    %345 = vmatprep.subr.mxu0 0.0
    %346 = vmatpush1.msra.mxu0 0.0
    %347 = vmatprep.subr.mxu0 0.0
    %348 = vmatpush1.msra.mxu0 0.0
    %349 = vmatprep.subr.mxu0 0.0
    %350 = vmatpush1.msra.mxu0 0.0
    %351 = vmatprep.subr.mxu0 0.0
    %352 = vmatpush1.msra.mxu0 0.0
    %353 = vmatprep.subr.mxu0 0.0
    %354 = vmatpush1.msra.mxu0 0.0
    %355 = vmatprep.subr.mxu0 0.0
    %356 = vmatpush1.msra.mxu0 0.0
    %357 = vmatprep.mubr.f32.mxu0 0.0
    %358 = vmatmul.mubr.f32.gmra.mrb[0].mxu0 %v291
    %v359 = vpop.f32.mrb[0].mxu0
    %v360 = vadd.f32 %v289, %v359
    %v361 = vpop.f32.mrb[0].mxu0
    %362 = vdwg.mxu0
    %v363 = vmax.f32 %v360, 0.0
    %v364 = vld [vmem:[#allocation2 + $0x90] sm:$0xff]
    %v365 = vld [vmem:[#allocation2 + $0x98] sm:$0xff]
    %v366 = vld [vmem:[#allocation2 + $0xa0] sm:$0xff]
    %v367 = vld [vmem:[#allocation2 + $0xa8] sm:$0xff]
    %v368 = vld [vmem:[#allocation2 + $0xb0] sm:$0xff]
    %v369 = vld [vmem:[#allocation2 + $0xb8] sm:$0xff]
    %v370 = vld [vmem:[#allocation2 + $0xc0] sm:$0x1]
    %v371 = vlaneseq
    %v372 = vshrl.u32 %v371, 7
    %v373 = vsub.s32 0, %v372
    %v374 = vrot.slane %v370, %v373
    %vm375 = vcmask 392192
    %v377 = vsel %vm375, %v363, 0
    %379 = vmatprep.subr.mxu0 0.0
    %380 = vmatpush1.msra.mxu0 %v364
    %381 = vmatprep.subr.mxu0 0.0
    %382 = vmatpush1.msra.mxu0 %v365
    %383 = vmatprep.subr.mxu0 0.0
    %384 = vmatpush1.msra.mxu0 %v366
    %385 = vmatprep.subr.mxu0 0.0
    %386 = vmatpush1.msra.mxu0 %v367
    %387 = vmatprep.subr.mxu0 0.0
    %388 = vmatpush1.msra.mxu0 %v368
    %389 = vmatprep.subr.mxu0 0.0
    %390 = vmatpush1.msra.mxu0 %v369
    %391 = vmatprep.subr.mxu0 0.0
    %392 = vmatpush1.msra.mxu0 0.0
    %393 = vmatprep.subr.mxu0 0.0
    %394 = vmatpush1.msra.mxu0 0.0
    %395 = vmatprep.subr.mxu0 0.0
    %396 = vmatpush1.msra.mxu0 0.0
    %397 = vmatprep.subr.mxu0 0.0
    %398 = vmatpush1.msra.mxu0 0.0
    %399 = vmatprep.subr.mxu0 0.0
    %400 = vmatpush1.msra.mxu0 0.0
    %401 = vmatprep.subr.mxu0 0.0
    %402 = vmatpush1.msra.mxu0 0.0
    %403 = vmatprep.subr.mxu0 0.0
    %404 = vmatpush1.msra.mxu0 0.0
    %405 = vmatprep.subr.mxu0 0.0
    %406 = vmatpush1.msra.mxu0 0.0
    %407 = vmatprep.subr.mxu0 0.0
    %408 = vmatpush1.msra.mxu0 0.0
    %409 = vmatprep.subr.mxu0 0.0
    %410 = vmatpush1.msra.mxu0 0.0
    %411 = vmatprep.subr.mxu0 0.0
    %412 = vmatpush1.msra.mxu0 0.0
    %413 = vmatprep.subr.mxu0 0.0
    %414 = vmatpush1.msra.mxu0 0.0
    %415 = vmatprep.subr.mxu0 0.0
    %416 = vmatpush1.msra.mxu0 0.0
    %417 = vmatprep.subr.mxu0 0.0
    %418 = vmatpush1.msra.mxu0 0.0
    %419 = vmatprep.subr.mxu0 0.0
    %420 = vmatpush1.msra.mxu0 0.0
    %421 = vmatprep.subr.mxu0 0.0
    %422 = vmatpush1.msra.mxu0 0.0
    %423 = vmatprep.subr.mxu0 0.0
    %424 = vmatpush1.msra.mxu0 0.0
    %425 = vmatprep.subr.mxu0 0.0
    %426 = vmatpush1.msra.mxu0 0.0
    %427 = vmatprep.subr.mxu0 0.0
    %428 = vmatpush1.msra.mxu0 0.0
    %429 = vmatprep.subr.mxu0 0.0
    %430 = vmatpush1.msra.mxu0 0.0
    %431 = vmatprep.subr.mxu0 0.0
    %432 = vmatpush1.msra.mxu0 0.0
    %433 = vmatprep.subr.mxu0 0.0
    %434 = vmatpush1.msra.mxu0 0.0
    %435 = vmatprep.subr.mxu0 0.0
    %436 = vmatpush1.msra.mxu0 0.0
    %437 = vmatprep.subr.mxu0 0.0
    %438 = vmatpush1.msra.mxu0 0.0
    %439 = vmatprep.subr.mxu0 0.0
    %440 = vmatpush1.msra.mxu0 0.0
    %441 = vmatprep.subr.mxu0 0.0
    %442 = vmatpush1.msra.mxu0 0.0
    %443 = vmatprep.mubr.f32.mxu0 0.0
    %444 = vmatmul.mubr.f32.gmra.mrb[0].mxu0 %v377
    %v445 = vpop.f32.mrb[0].mxu0
    %v446 = vadd.f32 %v374, %v445
    %v447 = vpop.f32.mrb[0].mxu0
    %448 = vdwg.mxu0
    %v449 = vtanh.pop %v446
    %451 = vrot.lane.b32.xlu0 %v449, 120
    %v452 = vpop.permute.xlu0 %451
    %v454 = vmul.f32 %v28, %v452
    %v456 = vsel %vm36, %v454, 0
    %458 = vmatprep.subr.mxu0 0.0
    %459 = vmatpush1.msra.mxu0 %v29
    %460 = vmatprep.subr.mxu0 0.0
    %461 = vmatpush1.msra.mxu0 %v42
    %462 = vmatprep.subr.mxu0 0.0
    %463 = vmatpush1.msra.mxu0 0.0
    %464 = vmatprep.subr.mxu0 0.0
    %465 = vmatpush1.msra.mxu0 0.0
    %466 = vmatprep.subr.mxu0 0.0
    %467 = vmatpush1.msra.mxu0 0.0
    %468 = vmatprep.subr.mxu0 0.0
    %469 = vmatpush1.msra.mxu0 0.0
    %470 = vmatprep.subr.mxu0 0.0
    %471 = vmatpush1.msra.mxu0 0.0
    %472 = vmatprep.subr.mxu0 0.0
    %473 = vmatpush1.msra.mxu0 0.0
    %474 = vmatprep.subr.mxu0 0.0
    %475 = vmatpush1.msra.mxu0 0.0
    %476 = vmatprep.subr.mxu0 0.0
    %477 = vmatpush1.msra.mxu0 0.0
    %478 = vmatprep.subr.mxu0 0.0
    %479 = vmatpush1.msra.mxu0 0.0
    %480 = vmatprep.subr.mxu0 0.0
    %481 = vmatpush1.msra.mxu0 0.0
    %482 = vmatprep.subr.mxu0 0.0
    %483 = vmatpush1.msra.mxu0 0.0
    %484 = vmatprep.subr.mxu0 0.0
    %485 = vmatpush1.msra.mxu0 0.0
    %486 = vmatprep.subr.mxu0 0.0
    %487 = vmatpush1.msra.mxu0 0.0
    %488 = vmatprep.subr.mxu0 0.0
    %489 = vmatpush1.msra.mxu0 0.0
    %490 = vmatprep.subr.mxu0 0.0
    %491 = vmatpush1.msra.mxu0 0.0
    %492 = vmatprep.subr.mxu0 0.0
    %493 = vmatpush1.msra.mxu0 0.0
    %494 = vmatprep.subr.mxu0 0.0
    %495 = vmatpush1.msra.mxu0 0.0
    %496 = vmatprep.subr.mxu0 0.0
    %497 = vmatpush1.msra.mxu0 0.0
    %498 = vmatprep.subr.mxu0 0.0
    %499 = vmatpush1.msra.mxu0 0.0
    %500 = vmatprep.subr.mxu0 0.0
    %501 = vmatpush1.msra.mxu0 0.0
    %502 = vmatprep.subr.mxu0 0.0
    %503 = vmatpush1.msra.mxu0 0.0
    %504 = vmatprep.subr.mxu0 0.0
    %505 = vmatpush1.msra.mxu0 0.0
    %506 = vmatprep.subr.mxu0 0.0
    %507 = vmatpush1.msra.mxu0 0.0
    %508 = vmatprep.subr.mxu0 0.0
    %509 = vmatpush1.msra.mxu0 0.0
    %510 = vmatprep.subr.mxu0 0.0
    %511 = vmatpush1.msra.mxu0 0.0
    %512 = vmatprep.subr.mxu0 0.0
    %513 = vmatpush1.msra.mxu0 0.0
    %514 = vmatprep.subr.mxu0 0.0
    %515 = vmatpush1.msra.mxu0 0.0
    %516 = vmatprep.subr.mxu0 0.0
    %517 = vmatpush1.msra.mxu0 0.0
    %518 = vmatprep.subr.mxu0 0.0
    %519 = vmatpush1.msra.mxu0 0.0
    %520 = vmatprep.subr.mxu0 0.0
    %521 = vmatpush1.msra.mxu0 0.0
    %522 = vmatprep.mubr.f32.mxu0 0.0
    %523 = vmatmul.mubr.f32.gmra.mrb[0].mxu0 %v456
    %v524 = vpop.f32.mrb[0].mxu0
    %v525 = vadd.f32 %v35, %v524
    %v526 = vpop.f32.mrb[0].mxu0
    %527 = vdwg.mxu0
    %v528 = vmax.f32 %v525, 0.0
    %v530 = vsel %vm124, %v528, 0
    %532 = vmatprep.subr.mxu0 0.0
    %533 = vmatpush1.msra.mxu0 %v115
    %534 = vmatprep.subr.mxu0 0.0
    %535 = vmatpush1.msra.mxu0 %v116
    %536 = vmatprep.subr.mxu0 0.0
    %537 = vmatpush1.msra.mxu0 %v117
    %538 = vmatprep.subr.mxu0 0.0
    %539 = vmatpush1.msra.mxu0 %v118
    %540 = vmatprep.subr.mxu0 0.0
    %541 = vmatpush1.msra.mxu0 0.0
    %542 = vmatprep.subr.mxu0 0.0
    %543 = vmatpush1.msra.mxu0 0.0
    %544 = vmatprep.subr.mxu0 0.0
    %545 = vmatpush1.msra.mxu0 0.0
    %546 = vmatprep.subr.mxu0 0.0
    %547 = vmatpush1.msra.mxu0 0.0
    %548 = vmatprep.subr.mxu0 0.0
    %549 = vmatpush1.msra.mxu0 0.0
    %550 = vmatprep.subr.mxu0 0.0
    %551 = vmatpush1.msra.mxu0 0.0
    %552 = vmatprep.subr.mxu0 0.0
    %553 = vmatpush1.msra.mxu0 0.0
    %554 = vmatprep.subr.mxu0 0.0
    %555 = vmatpush1.msra.mxu0 0.0
    %556 = vmatprep.subr.mxu0 0.0
    %557 = vmatpush1.msra.mxu0 0.0
    %558 = vmatprep.subr.mxu0 0.0
    %559 = vmatpush1.msra.mxu0 0.0
    %560 = vmatprep.subr.mxu0 0.0
    %561 = vmatpush1.msra.mxu0 0.0
    %562 = vmatprep.subr.mxu0 0.0
    %563 = vmatpush1.msra.mxu0 0.0
    %564 = vmatprep.subr.mxu0 0.0
    %565 = vmatpush1.msra.mxu0 0.0
    %566 = vmatprep.subr.mxu0 0.0
    %567 = vmatpush1.msra.mxu0 0.0
    %568 = vmatprep.subr.mxu0 0.0
    %569 = vmatpush1.msra.mxu0 0.0
    %570 = vmatprep.subr.mxu0 0.0
    %571 = vmatpush1.msra.mxu0 0.0
    %572 = vmatprep.subr.mxu0 0.0
    %573 = vmatpush1.msra.mxu0 0.0
    %574 = vmatprep.subr.mxu0 0.0
    %575 = vmatpush1.msra.mxu0 0.0
    %576 = vmatprep.subr.mxu0 0.0
    %577 = vmatpush1.msra.mxu0 0.0
    %578 = vmatprep.subr.mxu0 0.0
    %579 = vmatpush1.msra.mxu0 0.0
    %580 = vmatprep.subr.mxu0 0.0
    %581 = vmatpush1.msra.mxu0 0.0
    %582 = vmatprep.subr.mxu0 0.0
    %583 = vmatpush1.msra.mxu0 0.0
    %584 = vmatprep.subr.mxu0 0.0
    %585 = vmatpush1.msra.mxu0 0.0
    %586 = vmatprep.subr.mxu0 0.0
    %587 = vmatpush1.msra.mxu0 0.0
    %588 = vmatprep.subr.mxu0 0.0
    %589 = vmatpush1.msra.mxu0 0.0
    %590 = vmatprep.subr.mxu0 0.0
    %591 = vmatpush1.msra.mxu0 0.0
    %592 = vmatprep.subr.mxu0 0.0
    %593 = vmatpush1.msra.mxu0 0.0
    %594 = vmatprep.subr.mxu0 0.0
    %595 = vmatpush1.msra.mxu0 0.0
    %596 = vmatprep.mubr.f32.mxu0 0.0
    %597 = vmatmul.mubr.f32.gmra.mrb[0].mxu0 %v530
    %v598 = vpop.f32.mrb[0].mxu0
    %v599 = vadd.f32 %v123, %v598
    %v600 = vpop.f32.mrb[0].mxu0
    %601 = vdwg.mxu0
    %v602 = vmax.f32 %v599, 0.0
    %v604 = vsel %vm124, %v602, 0
    %606 = vmatprep.subr.mxu0 0.0
    %607 = vmatpush1.msra.mxu0 %v199
    %608 = vmatprep.subr.mxu0 0.0
    %609 = vmatpush1.msra.mxu0 %v200
    %610 = vmatprep.subr.mxu0 0.0
    %611 = vmatpush1.msra.mxu0 %v201
    %612 = vmatprep.subr.mxu0 0.0
    %613 = vmatpush1.msra.mxu0 %v202
    %614 = vmatprep.subr.mxu0 0.0
    %615 = vmatpush1.msra.mxu0 0.0
    %616 = vmatprep.subr.mxu0 0.0
    %617 = vmatpush1.msra.mxu0 0.0
    %618 = vmatprep.subr.mxu0 0.0
    %619 = vmatpush1.msra.mxu0 0.0
    %620 = vmatprep.subr.mxu0 0.0
    %621 = vmatpush1.msra.mxu0 0.0
    %622 = vmatprep.subr.mxu0 0.0
    %623 = vmatpush1.msra.mxu0 0.0
    %624 = vmatprep.subr.mxu0 0.0
    %625 = vmatpush1.msra.mxu0 0.0
    %626 = vmatprep.subr.mxu0 0.0
    %627 = vmatpush1.msra.mxu0 0.0
    %628 = vmatprep.subr.mxu0 0.0
    %629 = vmatpush1.msra.mxu0 0.0
    %630 = vmatprep.subr.mxu0 0.0
    %631 = vmatpush1.msra.mxu0 0.0
    %632 = vmatprep.subr.mxu0 0.0
    %633 = vmatpush1.msra.mxu0 0.0
    %634 = vmatprep.subr.mxu0 0.0
    %635 = vmatpush1.msra.mxu0 0.0
    %636 = vmatprep.subr.mxu0 0.0
    %637 = vmatpush1.msra.mxu0 0.0
    %638 = vmatprep.subr.mxu0 0.0
    %639 = vmatpush1.msra.mxu0 0.0
    %640 = vmatprep.subr.mxu0 0.0
    %641 = vmatpush1.msra.mxu0 0.0
    %642 = vmatprep.subr.mxu0 0.0
    %643 = vmatpush1.msra.mxu0 0.0
    %644 = vmatprep.subr.mxu0 0.0
    %645 = vmatpush1.msra.mxu0 0.0
    %646 = vmatprep.subr.mxu0 0.0
    %647 = vmatpush1.msra.mxu0 0.0
    %648 = vmatprep.subr.mxu0 0.0
    %649 = vmatpush1.msra.mxu0 0.0
    %650 = vmatprep.subr.mxu0 0.0
    %651 = vmatpush1.msra.mxu0 0.0
    %652 = vmatprep.subr.mxu0 0.0
    %653 = vmatpush1.msra.mxu0 0.0
    %654 = vmatprep.subr.mxu0 0.0
    %655 = vmatpush1.msra.mxu0 0.0
    %656 = vmatprep.subr.mxu0 0.0
    %657 = vmatpush1.msra.mxu0 0.0
    %658 = vmatprep.subr.mxu0 0.0
    %659 = vmatpush1.msra.mxu0 0.0
    %660 = vmatprep.subr.mxu0 0.0
    %661 = vmatpush1.msra.mxu0 0.0
    %662 = vmatprep.subr.mxu0 0.0
    %663 = vmatpush1.msra.mxu0 0.0
    %664 = vmatprep.subr.mxu0 0.0
    %665 = vmatpush1.msra.mxu0 0.0
    %666 = vmatprep.subr.mxu0 0.0
    %667 = vmatpush1.msra.mxu0 0.0
    %668 = vmatprep.subr.mxu0 0.0
    %669 = vmatpush1.msra.mxu0 0.0
    %670 = vmatprep.mubr.f32.mxu0 0.0
    %671 = vmatmul.mubr.f32.gmra.mrb[0].mxu0 %v604
    %v672 = vpop.f32.mrb[0].mxu0
    %v673 = vadd.f32 %v207, %v672
    %v674 = vpop.f32.mrb[0].mxu0
    %675 = vdwg.mxu0
    %v676 = vld [vmem:[#allocation2 + $0xc8] sm:$0xff]
    %v677 = vld [vmem:[#allocation2 + $0xd0] sm:$0xff]
    %v678 = vld [vmem:[#allocation2 + $0xd8] sm:$0xff]
    %v679 = vld [vmem:[#allocation2 + $0xe0] sm:$0xff]
    %v680 = vld [vmem:[#allocation2 + $0xe8] sm:$0x1]
    %v681 = vlaneseq
    %v682 = vshrl.u32 %v681, 7
    %v683 = vsub.s32 0, %v682
    %v684 = vrot.slane %v680, %v683
    %v686 = vsel %vm124, %v673, 0
    %688 = vmatprep.subr.mxu0 0.0
    %689 = vmatpush1.msra.mxu0 %v676
    %690 = vmatprep.subr.mxu0 0.0
    %691 = vmatpush1.msra.mxu0 %v677
    %692 = vmatprep.subr.mxu0 0.0
    %693 = vmatpush1.msra.mxu0 %v678
    %694 = vmatprep.subr.mxu0 0.0
    %695 = vmatpush1.msra.mxu0 %v679
    %696 = vmatprep.subr.mxu0 0.0
    %697 = vmatpush1.msra.mxu0 0.0
    %698 = vmatprep.subr.mxu0 0.0
    %699 = vmatpush1.msra.mxu0 0.0
    %700 = vmatprep.subr.mxu0 0.0
    %701 = vmatpush1.msra.mxu0 0.0
    %702 = vmatprep.subr.mxu0 0.0
    %703 = vmatpush1.msra.mxu0 0.0
    %704 = vmatprep.subr.mxu0 0.0
    %705 = vmatpush1.msra.mxu0 0.0
    %706 = vmatprep.subr.mxu0 0.0
    %707 = vmatpush1.msra.mxu0 0.0
    %708 = vmatprep.subr.mxu0 0.0
    %709 = vmatpush1.msra.mxu0 0.0
    %710 = vmatprep.subr.mxu0 0.0
    %711 = vmatpush1.msra.mxu0 0.0
    %712 = vmatprep.subr.mxu0 0.0
    %713 = vmatpush1.msra.mxu0 0.0
    %714 = vmatprep.subr.mxu0 0.0
    %715 = vmatpush1.msra.mxu0 0.0
    %716 = vmatprep.subr.mxu0 0.0
    %717 = vmatpush1.msra.mxu0 0.0
    %718 = vmatprep.subr.mxu0 0.0
    %719 = vmatpush1.msra.mxu0 0.0
    %720 = vmatprep.subr.mxu0 0.0
    %721 = vmatpush1.msra.mxu0 0.0
    %722 = vmatprep.subr.mxu0 0.0
    %723 = vmatpush1.msra.mxu0 0.0
    %724 = vmatprep.subr.mxu0 0.0
    %725 = vmatpush1.msra.mxu0 0.0
    %726 = vmatprep.subr.mxu0 0.0
    %727 = vmatpush1.msra.mxu0 0.0
    %728 = vmatprep.subr.mxu0 0.0
    %729 = vmatpush1.msra.mxu0 0.0
    %730 = vmatprep.subr.mxu0 0.0
    %731 = vmatpush1.msra.mxu0 0.0
    %732 = vmatprep.subr.mxu0 0.0
    %733 = vmatpush1.msra.mxu0 0.0
    %734 = vmatprep.subr.mxu0 0.0
    %735 = vmatpush1.msra.mxu0 0.0
    %736 = vmatprep.subr.mxu0 0.0
    %737 = vmatpush1.msra.mxu0 0.0
    %738 = vmatprep.subr.mxu0 0.0
    %739 = vmatpush1.msra.mxu0 0.0
    %740 = vmatprep.subr.mxu0 0.0
    %741 = vmatpush1.msra.mxu0 0.0
    %742 = vmatprep.subr.mxu0 0.0
    %743 = vmatpush1.msra.mxu0 0.0
    %744 = vmatprep.subr.mxu0 0.0
    %745 = vmatpush1.msra.mxu0 0.0
    %746 = vmatprep.subr.mxu0 0.0
    %747 = vmatpush1.msra.mxu0 0.0
    %748 = vmatprep.subr.mxu0 0.0
    %749 = vmatpush1.msra.mxu0 0.0
    %750 = vmatprep.subr.mxu0 0.0
    %751 = vmatpush1.msra.mxu0 0.0
    %752 = vmatprep.mubr.f32.mxu0 0.0
    %753 = vmatmul.mubr.f32.gmra.mrb[0].mxu0 %v686
    %v754 = vpop.f32.mrb[0].mxu0
    %v755 = vadd.f32 %v684, %v754
    %v756 = vpop.f32.mrb[0].mxu0
    %757 = vdwg.mxu0
    %v758 = vmax.f32 %v755, 0.0
    %v759 = vld [vmem:[#allocation2 + $0xf0] sm:$0xff]
    %v760 = vld [vmem:[#allocation2 + $0xf8] sm:$0xff]
    %v761 = vld [vmem:[#allocation2 + $0x100] sm:$0xff]
    %v762 = vld [vmem:[#allocation2 + $0x108] sm:$0xff]
    %v763 = vld [vmem:[#allocation2 + $0x110] sm:$0x1]
    %v764 = vlaneseq
    %v765 = vshrl.u32 %v764, 7
    %v766 = vsub.s32 0, %v765
    %v767 = vrot.slane %v763, %v766
    %v769 = vsel %vm124, %v758, 0
    %771 = vmatprep.subr.mxu0 0.0
    %772 = vmatpush1.msra.mxu0 %v759
    %773 = vmatprep.subr.mxu0 0.0
    %774 = vmatpush1.msra.mxu0 %v760
    %775 = vmatprep.subr.mxu0 0.0
    %776 = vmatpush1.msra.mxu0 %v761
    %777 = vmatprep.subr.mxu0 0.0
    %778 = vmatpush1.msra.mxu0 %v762
    %779 = vmatprep.subr.mxu0 0.0
    %780 = vmatpush1.msra.mxu0 0.0
    %781 = vmatprep.subr.mxu0 0.0
    %782 = vmatpush1.msra.mxu0 0.0
    %783 = vmatprep.subr.mxu0 0.0
    %784 = vmatpush1.msra.mxu0 0.0
    %785 = vmatprep.subr.mxu0 0.0
    %786 = vmatpush1.msra.mxu0 0.0
    %787 = vmatprep.subr.mxu0 0.0
    %788 = vmatpush1.msra.mxu0 0.0
    %789 = vmatprep.subr.mxu0 0.0
    %790 = vmatpush1.msra.mxu0 0.0
    %791 = vmatprep.subr.mxu0 0.0
    %792 = vmatpush1.msra.mxu0 0.0
    %793 = vmatprep.subr.mxu0 0.0
    %794 = vmatpush1.msra.mxu0 0.0
    %795 = vmatprep.subr.mxu0 0.0
    %796 = vmatpush1.msra.mxu0 0.0
    %797 = vmatprep.subr.mxu0 0.0
    %798 = vmatpush1.msra.mxu0 0.0
    %799 = vmatprep.subr.mxu0 0.0
    %800 = vmatpush1.msra.mxu0 0.0
    %801 = vmatprep.subr.mxu0 0.0
    %802 = vmatpush1.msra.mxu0 0.0
    %803 = vmatprep.subr.mxu0 0.0
    %804 = vmatpush1.msra.mxu0 0.0
    %805 = vmatprep.subr.mxu0 0.0
    %806 = vmatpush1.msra.mxu0 0.0
    %807 = vmatprep.subr.mxu0 0.0
    %808 = vmatpush1.msra.mxu0 0.0
    %809 = vmatprep.subr.mxu0 0.0
    %810 = vmatpush1.msra.mxu0 0.0
    %811 = vmatprep.subr.mxu0 0.0
    %812 = vmatpush1.msra.mxu0 0.0
    %813 = vmatprep.subr.mxu0 0.0
    %814 = vmatpush1.msra.mxu0 0.0
    %815 = vmatprep.subr.mxu0 0.0
    %816 = vmatpush1.msra.mxu0 0.0
    %817 = vmatprep.subr.mxu0 0.0
    %818 = vmatpush1.msra.mxu0 0.0
    %819 = vmatprep.subr.mxu0 0.0
    %820 = vmatpush1.msra.mxu0 0.0
    %821 = vmatprep.subr.mxu0 0.0
    %822 = vmatpush1.msra.mxu0 0.0
    %823 = vmatprep.subr.mxu0 0.0
    %824 = vmatpush1.msra.mxu0 0.0
    %825 = vmatprep.subr.mxu0 0.0
    %826 = vmatpush1.msra.mxu0 0.0
    %827 = vmatprep.subr.mxu0 0.0
    %828 = vmatpush1.msra.mxu0 0.0
    %829 = vmatprep.subr.mxu0 0.0
    %830 = vmatpush1.msra.mxu0 0.0
    %831 = vmatprep.subr.mxu0 0.0
    %832 = vmatpush1.msra.mxu0 0.0
    %833 = vmatprep.subr.mxu0 0.0
    %834 = vmatpush1.msra.mxu0 0.0
    %835 = vmatprep.mubr.f32.mxu0 0.0
    %836 = vmatmul.mubr.f32.gmra.mrb[0].mxu0 %v769
    %v837 = vpop.f32.mrb[0].mxu0
    %v838 = vadd.f32 %v767, %v837
    %v839 = vpop.f32.mrb[0].mxu0
    %840 = vdwg.mxu0
    %vm841 = vcmp.gt.f32.partialorder %v838, 20.0
    %v842 = vmin.f32 %v838, 20.0
    %v843 = vmul.f32 %v842, 1.442695
    %v844 = vpow.pop %v843
    %v845 = vadd.f32 %v844, 1.0
    %v846 = vlog2.pop %v845
    %v847 = vmul.f32 %v846, 0.6931472
    %v848 = vmul.f32 -0.5, %v844
    %v849 = vadd.f32 %v848, 1.0
    %v850 = vmul.f32 %v849, %v844
    %v851 = vand.u32 2147483647, %v844
    %vm852 = vcmp.lt.f32.partialorder %v851, 0.0004427343
    %v853 = vsel %vm852, %v850, %v847
    %v854 = vsel %vm841, %v838, %v853
    %v855 = vld [vmem:[%s1] sm:$0xff]
    %v856 = vmul.f32 %v838, 0.5
    %v857 = vmul.f32 %v856, 1.442695
    %v858 = vpow.pop %v857
    %860 = vrot.lane.b32.xlu0 %v855, 7
    %v861 = vpop.permute.xlu0 %860
    %v863 = vmul.f32 %v858, %v861
    %865 = vrot.lane.b32.xlu0 %v863, 121
    %v866 = vpop.permute.xlu0 %865
    %v868 = vadd.f32 %v854, %v866
    %v869 = vmax.f32 %v868, 0.0
    %v870 = vmin.f32 %v869, 1.0
    %v871 = vmul.f32 %v446, 0.5
    %v872 = vmul.f32 %v871, 1.442695
    %v873 = vpow.pop %v872
    %874 = vrot.lane.b32.xlu0 %v855, 125
    %v875 = vpop.permute.xlu0 %874
    %v877 = vmul.f32 %v873, %v875
    %879 = vrot.lane.b32.xlu0 %v877, 124
    %v880 = vpop.permute.xlu0 %879
    %v882 = vadd.f32 %v446, %v880
    %v883 = vmul.f32 %v870, 0.9
    %v884 = vadd.f32 %v883, 0.1
    %v885 = vmax.f32 %v884, 1e-06
    %v886 = vlog2.pop %v885
    %v887 = vmul.f32 %v886, 0.6931472
    %v888 = vmul.f32 %v887, 0.5
    %v889 = vadd.f32 %v888, 1.6186484
    %v890 = vmul.f32 %v889, 1.442695
    %v891 = vpow.pop %v890
    %v892 = vmul.f32 %v887, 0.2535
    %v893 = vadd.f32 %v892, 2.9376547
    %v894 = vmul.f32 %v893, 1.442695
    %v895 = vpow.pop %v894
    %v896 = vld [vmem:[#allocation2 + $0x118] sm:$0x7f]
    %v897 = vld [vmem:[#allocation2 + $0x120] sm:$0x1]
    %899 = vset.pattern.permute.xlu0 6
    %900 = vperm.xlu0 %899, %v891
    %v901 = vpop.permute.xlu0 %900
    %v903 = vlaneseq
    %v904 = vshrl.u32 %v903, 7
    %v905 = vsub.s32 0, %v904
    %v906 = vrot.slane %v897, %v905
    %v907 = vmul.f32 %v901, %v906
    %vm908 = vcmask 56320
    %v910 = vsel %vm908, %v870, 0
    %vm912 = vcmask 1046528
    %v914 = vsel %vm912, %v896, 0
    %916 = vmatprep.subr.mxu0 0.0
    %917 = vmatpush1.msra.mxu0 %v914
    %918 = vmatprep.subr.mxu0 0.0
    %919 = vmatpush1.msra.mxu0 0.0
    %920 = vmatprep.subr.mxu0 0.0
    %921 = vmatpush1.msra.mxu0 0.0
    %922 = vmatprep.subr.mxu0 0.0
    %923 = vmatpush1.msra.mxu0 0.0
    %924 = vmatprep.subr.mxu0 0.0
    %925 = vmatpush1.msra.mxu0 0.0
    %926 = vmatprep.subr.mxu0 0.0
    %927 = vmatpush1.msra.mxu0 0.0
    %928 = vmatprep.subr.mxu0 0.0
    %929 = vmatpush1.msra.mxu0 0.0
    %930 = vmatprep.subr.mxu0 0.0
    %931 = vmatpush1.msra.mxu0 0.0
    %932 = vmatprep.subr.mxu0 0.0
    %933 = vmatpush1.msra.mxu0 0.0
    %934 = vmatprep.subr.mxu0 0.0
    %935 = vmatpush1.msra.mxu0 0.0
    %936 = vmatprep.subr.mxu0 0.0
    %937 = vmatpush1.msra.mxu0 0.0
    %938 = vmatprep.subr.mxu0 0.0
    %939 = vmatpush1.msra.mxu0 0.0
    %940 = vmatprep.subr.mxu0 0.0
    %941 = vmatpush1.msra.mxu0 0.0
    %942 = vmatprep.subr.mxu0 0.0
    %943 = vmatpush1.msra.mxu0 0.0
    %944 = vmatprep.subr.mxu0 0.0
    %945 = vmatpush1.msra.mxu0 0.0
    %946 = vmatprep.subr.mxu0 0.0
    %947 = vmatpush1.msra.mxu0 0.0
    %948 = vmatprep.subr.mxu0 0.0
    %949 = vmatpush1.msra.mxu0 0.0
    %950 = vmatprep.subr.mxu0 0.0
    %951 = vmatpush1.msra.mxu0 0.0
    %952 = vmatprep.subr.mxu0 0.0
    %953 = vmatpush1.msra.mxu0 0.0
    %954 = vmatprep.subr.mxu0 0.0
    %955 = vmatpush1.msra.mxu0 0.0
    %956 = vmatprep.subr.mxu0 0.0
    %957 = vmatpush1.msra.mxu0 0.0
    %958 = vmatprep.subr.mxu0 0.0
    %959 = vmatpush1.msra.mxu0 0.0
    %960 = vmatprep.subr.mxu0 0.0
    %961 = vmatpush1.msra.mxu0 0.0
    %962 = vmatprep.subr.mxu0 0.0
    %963 = vmatpush1.msra.mxu0 0.0
    %964 = vmatprep.subr.mxu0 0.0
    %965 = vmatpush1.msra.mxu0 0.0
    %966 = vmatprep.subr.mxu0 0.0
    %967 = vmatpush1.msra.mxu0 0.0
    %968 = vmatprep.subr.mxu0 0.0
    %969 = vmatpush1.msra.mxu0 0.0
    %970 = vmatprep.subr.mxu0 0.0
    %971 = vmatpush1.msra.mxu0 0.0
    %972 = vmatprep.subr.mxu0 0.0
    %973 = vmatpush1.msra.mxu0 0.0
    %974 = vmatprep.subr.mxu0 0.0
    %975 = vmatpush1.msra.mxu0 0.0
    %976 = vmatprep.subr.mxu0 0.0
    %977 = vmatpush1.msra.mxu0 0.0
    %978 = vmatprep.subr.mxu0 0.0
    %979 = vmatpush1.msra.mxu0 0.0
    %980 = vmatprep.mubr.f32.mxu0 0.0
    %981 = vmatmul.mubr.f32.gmra.mrb[0].mxu0 %v910
    %v982 = vpop.f32.mrb[0].mxu0
    %v983 = vadd.f32 %v907, %v982
    %v984 = vpop.f32.mrb[0].mxu0
    %985 = vdwg.mxu0
    %v986 = vld [vmem:[#allocation2 + $0x121] sm:$0x1]
    %988 = vset.pattern.permute.xlu0 6
    %989 = vperm.xlu0 %988, %v895
    %v990 = vpop.permute.xlu0 %989
    %v992 = vlaneseq
    %v993 = vshrl.u32 %v992, 7
    %v994 = vsub.s32 0, %v993
    %v995 = vrot.slane %v986, %v994
    %v996 = vmul.f32 %v990, %v995
    %v997 = vadd.f32 %v983, %v996
    %v998 = vld [vmem:[#allocation2 + $0x122] sm:$0x1]
    %v999 = vlaneseq
    %v1000 = vshrl.u32 %v999, 7
    %v1001 = vsub.s32 0, %v1000
    %v1002 = vrot.slane %v998, %v1001
    %v1003 = vadd.f32 %v997, %v1002
    %v1004 = vld [vmem:[#allocation2 + $0x128] sm:$0x7f]
    %v1005 = vld [vmem:[#allocation2 + $0x130] sm:$0xf]
    %vm1006 = vcmask 31744
    %v1008 = vsel %vm1006, %v882, 0
    %vm1010 = vcmask 1043456
    %v1012 = vsel %vm1010, %v1005, 0
    %1014 = vmatprep.subr.mxu0 0.0
    %1015 = vmatpush1.msra.mxu0 %v1012
    %1016 = vmatprep.subr.mxu0 0.0
    %1017 = vmatpush1.msra.mxu0 0.0
    %1018 = vmatprep.subr.mxu0 0.0
    %1019 = vmatpush1.msra.mxu0 0.0
    %1020 = vmatprep.subr.mxu0 0.0
    %1021 = vmatpush1.msra.mxu0 0.0
    %1022 = vmatprep.subr.mxu0 0.0
    %1023 = vmatpush1.msra.mxu0 0.0
    %1024 = vmatprep.subr.mxu0 0.0
    %1025 = vmatpush1.msra.mxu0 0.0
    %1026 = vmatprep.subr.mxu0 0.0
    %1027 = vmatpush1.msra.mxu0 0.0
    %1028 = vmatprep.subr.mxu0 0.0
    %1029 = vmatpush1.msra.mxu0 0.0
    %1030 = vmatprep.subr.mxu0 0.0
    %1031 = vmatpush1.msra.mxu0 0.0
    %1032 = vmatprep.subr.mxu0 0.0
    %1033 = vmatpush1.msra.mxu0 0.0
    %1034 = vmatprep.subr.mxu0 0.0
    %1035 = vmatpush1.msra.mxu0 0.0
    %1036 = vmatprep.subr.mxu0 0.0
    %1037 = vmatpush1.msra.mxu0 0.0
    %1038 = vmatprep.subr.mxu0 0.0
    %1039 = vmatpush1.msra.mxu0 0.0
    %1040 = vmatprep.subr.mxu0 0.0
    %1041 = vmatpush1.msra.mxu0 0.0
    %1042 = vmatprep.subr.mxu0 0.0
    %1043 = vmatpush1.msra.mxu0 0.0
    %1044 = vmatprep.subr.mxu0 0.0
    %1045 = vmatpush1.msra.mxu0 0.0
    %1046 = vmatprep.subr.mxu0 0.0
    %1047 = vmatpush1.msra.mxu0 0.0
    %1048 = vmatprep.subr.mxu0 0.0
    %1049 = vmatpush1.msra.mxu0 0.0
    %1050 = vmatprep.subr.mxu0 0.0
    %1051 = vmatpush1.msra.mxu0 0.0
    %1052 = vmatprep.subr.mxu0 0.0
    %1053 = vmatpush1.msra.mxu0 0.0
    %1054 = vmatprep.subr.mxu0 0.0
    %1055 = vmatpush1.msra.mxu0 0.0
    %1056 = vmatprep.subr.mxu0 0.0
    %1057 = vmatpush1.msra.mxu0 0.0
    %1058 = vmatprep.subr.mxu0 0.0
    %1059 = vmatpush1.msra.mxu0 0.0
    %1060 = vmatprep.subr.mxu0 0.0
    %1061 = vmatpush1.msra.mxu0 0.0
    %1062 = vmatprep.subr.mxu0 0.0
    %1063 = vmatpush1.msra.mxu0 0.0
    %1064 = vmatprep.subr.mxu0 0.0
    %1065 = vmatpush1.msra.mxu0 0.0
    %1066 = vmatprep.subr.mxu0 0.0
    %1067 = vmatpush1.msra.mxu0 0.0
    %1068 = vmatprep.subr.mxu0 0.0
    %1069 = vmatpush1.msra.mxu0 0.0
    %1070 = vmatprep.subr.mxu0 0.0
    %1071 = vmatpush1.msra.mxu0 0.0
    %1072 = vmatprep.subr.mxu0 0.0
    %1073 = vmatpush1.msra.mxu0 0.0
    %1074 = vmatprep.subr.mxu0 0.0
    %1075 = vmatpush1.msra.mxu0 0.0
    %1076 = vmatprep.subr.mxu0 0.0
    %1077 = vmatpush1.msra.mxu0 0.0
    %1078 = vmatprep.mubr.f32.mxu0 0.0
    %1079 = vmatmul.mubr.f32.gmra.mrb[0].mxu0 %v1008
    %v1080 = vpop.f32.mrb[0].mxu0
    %v1081 = vadd.f32 0.0, %v1080
    %v1082 = vpop.f32.mrb[0].mxu0
    %1083 = vdwg.mxu0
    %v1085 = vsel %vm912, %v1004, 0
    %1087 = vmatprep.subr.mxu0 0.0
    %1088 = vmatpush1.msra.mxu0 %v1085
    %1089 = vmatprep.subr.mxu0 0.0
    %1090 = vmatpush1.msra.mxu0 0.0
    %1091 = vmatprep.subr.mxu0 0.0
    %1092 = vmatpush1.msra.mxu0 0.0
    %1093 = vmatprep.subr.mxu0 0.0
    %1094 = vmatpush1.msra.mxu0 0.0
    %1095 = vmatprep.subr.mxu0 0.0
    %1096 = vmatpush1.msra.mxu0 0.0
    %1097 = vmatprep.subr.mxu0 0.0
    %1098 = vmatpush1.msra.mxu0 0.0
    %1099 = vmatprep.subr.mxu0 0.0
    %1100 = vmatpush1.msra.mxu0 0.0
    %1101 = vmatprep.subr.mxu0 0.0
    %1102 = vmatpush1.msra.mxu0 0.0
    %1103 = vmatprep.subr.mxu0 0.0
    %1104 = vmatpush1.msra.mxu0 0.0
    %1105 = vmatprep.subr.mxu0 0.0
    %1106 = vmatpush1.msra.mxu0 0.0
    %1107 = vmatprep.subr.mxu0 0.0
    %1108 = vmatpush1.msra.mxu0 0.0
    %1109 = vmatprep.subr.mxu0 0.0
    %1110 = vmatpush1.msra.mxu0 0.0
    %1111 = vmatprep.subr.mxu0 0.0
    %1112 = vmatpush1.msra.mxu0 0.0
    %1113 = vmatprep.subr.mxu0 0.0
    %1114 = vmatpush1.msra.mxu0 0.0
    %1115 = vmatprep.subr.mxu0 0.0
    %1116 = vmatpush1.msra.mxu0 0.0
    %1117 = vmatprep.subr.mxu0 0.0
    %1118 = vmatpush1.msra.mxu0 0.0
    %1119 = vmatprep.subr.mxu0 0.0
    %1120 = vmatpush1.msra.mxu0 0.0
    %1121 = vmatprep.subr.mxu0 0.0
    %1122 = vmatpush1.msra.mxu0 0.0
    %1123 = vmatprep.subr.mxu0 0.0
    %1124 = vmatpush1.msra.mxu0 0.0
    %1125 = vmatprep.subr.mxu0 0.0
    %1126 = vmatpush1.msra.mxu0 0.0
    %1127 = vmatprep.subr.mxu0 0.0
    %1128 = vmatpush1.msra.mxu0 0.0
    %1129 = vmatprep.subr.mxu0 0.0
    %1130 = vmatpush1.msra.mxu0 0.0
    %1131 = vmatprep.subr.mxu0 0.0
    %1132 = vmatpush1.msra.mxu0 0.0
    %1133 = vmatprep.subr.mxu0 0.0
    %1134 = vmatpush1.msra.mxu0 0.0
    %1135 = vmatprep.subr.mxu0 0.0
    %1136 = vmatpush1.msra.mxu0 0.0
    %1137 = vmatprep.subr.mxu0 0.0
    %1138 = vmatpush1.msra.mxu0 0.0
    %1139 = vmatprep.subr.mxu0 0.0
    %1140 = vmatpush1.msra.mxu0 0.0
    %1141 = vmatprep.subr.mxu0 0.0
    %1142 = vmatpush1.msra.mxu0 0.0
    %1143 = vmatprep.subr.mxu0 0.0
    %1144 = vmatpush1.msra.mxu0 0.0
    %1145 = vmatprep.subr.mxu0 0.0
    %1146 = vmatpush1.msra.mxu0 0.0
    %1147 = vmatprep.subr.mxu0 0.0
    %1148 = vmatpush1.msra.mxu0 0.0
    %1149 = vmatprep.subr.mxu0 0.0
    %1150 = vmatpush1.msra.mxu0 0.0
    %1151 = vmatprep.mubr.f32.mxu0 0.0
    %1152 = vmatmul.mubr.f32.gmra.mrb[0].mxu0 %v910
    %v1153 = vpop.f32.mrb[0].mxu0
    %v1154 = vadd.f32 %v1081, %v1153
    %v1155 = vpop.f32.mrb[0].mxu0
    %1156 = vdwg.mxu0
    %v1157 = vld [vmem:[#allocation2 + $0x138] sm:$0x1]
    %v1158 = vlaneseq
    %v1159 = vshrl.u32 %v1158, 7
    %v1160 = vsub.s32 0, %v1159
    %v1161 = vrot.slane %v1157, %v1160
    %v1162 = vadd.f32 %v1154, %v1161
    %v1163 = vmax.f32 %v1162, 0.0
    %v1164 = vld [vmem:[#allocation2 + $0x140] sm:$0xff]
    %v1165 = vld [vmem:[#allocation2 + $0x148] sm:$0xff]
    %v1166 = vld [vmem:[#allocation2 + $0x150] sm:$0xff]
    %v1167 = vld [vmem:[#allocation2 + $0x158] sm:$0xff]
    %v1168 = vld [vmem:[#allocation2 + $0x160] sm:$0x1]
    %v1169 = vlaneseq
    %v1170 = vshrl.u32 %v1169, 7
    %v1171 = vsub.s32 0, %v1170
    %v1172 = vrot.slane %v1168, %v1171
    %v1174 = vsel %vm124, %v1163, 0
    %1176 = vmatprep.subr.mxu0 0.0
    %1177 = vmatpush1.msra.mxu0 %v1164
    %1178 = vmatprep.subr.mxu0 0.0
    %1179 = vmatpush1.msra.mxu0 %v1165
    %1180 = vmatprep.subr.mxu0 0.0
    %1181 = vmatpush1.msra.mxu0 %v1166
    %1182 = vmatprep.subr.mxu0 0.0
    %1183 = vmatpush1.msra.mxu0 %v1167
    %1184 = vmatprep.subr.mxu0 0.0
    %1185 = vmatpush1.msra.mxu0 0.0
    %1186 = vmatprep.subr.mxu0 0.0
    %1187 = vmatpush1.msra.mxu0 0.0
    %1188 = vmatprep.subr.mxu0 0.0
    %1189 = vmatpush1.msra.mxu0 0.0
    %1190 = vmatprep.subr.mxu0 0.0
    %1191 = vmatpush1.msra.mxu0 0.0
    %1192 = vmatprep.subr.mxu0 0.0
    %1193 = vmatpush1.msra.mxu0 0.0
    %1194 = vmatprep.subr.mxu0 0.0
    %1195 = vmatpush1.msra.mxu0 0.0
    %1196 = vmatprep.subr.mxu0 0.0
    %1197 = vmatpush1.msra.mxu0 0.0
    %1198 = vmatprep.subr.mxu0 0.0
    %1199 = vmatpush1.msra.mxu0 0.0
    %1200 = vmatprep.subr.mxu0 0.0
    %1201 = vmatpush1.msra.mxu0 0.0
    %1202 = vmatprep.subr.mxu0 0.0
    %1203 = vmatpush1.msra.mxu0 0.0
    %1204 = vmatprep.subr.mxu0 0.0
    %1205 = vmatpush1.msra.mxu0 0.0
    %1206 = vmatprep.subr.mxu0 0.0
    %1207 = vmatpush1.msra.mxu0 0.0
    %1208 = vmatprep.subr.mxu0 0.0
    %1209 = vmatpush1.msra.mxu0 0.0
    %1210 = vmatprep.subr.mxu0 0.0
    %1211 = vmatpush1.msra.mxu0 0.0
    %1212 = vmatprep.subr.mxu0 0.0
    %1213 = vmatpush1.msra.mxu0 0.0
    %1214 = vmatprep.subr.mxu0 0.0
    %1215 = vmatpush1.msra.mxu0 0.0
    %1216 = vmatprep.subr.mxu0 0.0
    %1217 = vmatpush1.msra.mxu0 0.0
    %1218 = vmatprep.subr.mxu0 0.0
    %1219 = vmatpush1.msra.mxu0 0.0
    %1220 = vmatprep.subr.mxu0 0.0
    %1221 = vmatpush1.msra.mxu0 0.0
    %1222 = vmatprep.subr.mxu0 0.0
    %1223 = vmatpush1.msra.mxu0 0.0
    %1224 = vmatprep.subr.mxu0 0.0
    %1225 = vmatpush1.msra.mxu0 0.0
    %1226 = vmatprep.subr.mxu0 0.0
    %1227 = vmatpush1.msra.mxu0 0.0
    %1228 = vmatprep.subr.mxu0 0.0
    %1229 = vmatpush1.msra.mxu0 0.0
    %1230 = vmatprep.subr.mxu0 0.0
    %1231 = vmatpush1.msra.mxu0 0.0
    %1232 = vmatprep.subr.mxu0 0.0
    %1233 = vmatpush1.msra.mxu0 0.0
    %1234 = vmatprep.subr.mxu0 0.0
    %1235 = vmatpush1.msra.mxu0 0.0
    %1236 = vmatprep.subr.mxu0 0.0
    %1237 = vmatpush1.msra.mxu0 0.0
    %1238 = vmatprep.subr.mxu0 0.0
    %1239 = vmatpush1.msra.mxu0 0.0
    %1240 = vmatprep.mubr.f32.mxu0 0.0
    %1241 = vmatmul.mubr.f32.gmra.mrb[0].mxu0 %v1174
    %v1242 = vpop.f32.mrb[0].mxu0
    %v1243 = vadd.f32 %v1172, %v1242
    %v1244 = vpop.f32.mrb[0].mxu0
    %1245 = vdwg.mxu0
    %v1246 = vmax.f32 %v1243, 0.0
    %v1247 = vld [vmem:[#allocation2 + $0x168] sm:$0xff]
    %v1248 = vld [vmem:[#allocation2 + $0x170] sm:$0xff]
    %v1249 = vld [vmem:[#allocation2 + $0x178] sm:$0xff]
    %v1250 = vld [vmem:[#allocation2 + $0x180] sm:$0xff]
    %v1251 = vld [vmem:[#allocation2 + $0x188] sm:$0xff]
    %v1252 = vld [vmem:[#allocation2 + $0x190] sm:$0xff]
    %v1253 = vld [vmem:[#allocation2 + $0x198] sm:$0xff]
    %v1254 = vld [vmem:[#allocation2 + $0x1a0] sm:$0xff]
    %v1255 = vld [vmem:[#allocation2 + $0x1a8] sm:$0x1]
    %v1256 = vlaneseq
    %v1257 = vshrl.u32 %v1256, 7
    %v1258 = vsub.s32 0, %v1257
    %v1259 = vrot.slane %v1255, %v1258
    %vm1260 = vcmask 523264
    %v1262 = vsel %vm1260, %v1246, 0
    %1264 = vmatprep.subr.mxu0 0.0
    %1265 = vmatpush1.msra.mxu0 %v1247
    %1266 = vmatprep.subr.mxu0 0.0
    %1267 = vmatpush1.msra.mxu0 %v1248
    %1268 = vmatprep.subr.mxu0 0.0
    %1269 = vmatpush1.msra.mxu0 %v1249
    %1270 = vmatprep.subr.mxu0 0.0
    %1271 = vmatpush1.msra.mxu0 %v1250
    %1272 = vmatprep.subr.mxu0 0.0
    %1273 = vmatpush1.msra.mxu0 %v1251
    %1274 = vmatprep.subr.mxu0 0.0
    %1275 = vmatpush1.msra.mxu0 %v1252
    %1276 = vmatprep.subr.mxu0 0.0
    %1277 = vmatpush1.msra.mxu0 %v1253
    %1278 = vmatprep.subr.mxu0 0.0
    %1279 = vmatpush1.msra.mxu0 %v1254
    %1280 = vmatprep.subr.mxu0 0.0
    %1281 = vmatpush1.msra.mxu0 0.0
    %1282 = vmatprep.subr.mxu0 0.0
    %1283 = vmatpush1.msra.mxu0 0.0
    %1284 = vmatprep.subr.mxu0 0.0
    %1285 = vmatpush1.msra.mxu0 0.0
    %1286 = vmatprep.subr.mxu0 0.0
    %1287 = vmatpush1.msra.mxu0 0.0
    %1288 = vmatprep.subr.mxu0 0.0
    %1289 = vmatpush1.msra.mxu0 0.0
    %1290 = vmatprep.subr.mxu0 0.0
    %1291 = vmatpush1.msra.mxu0 0.0
    %1292 = vmatprep.subr.mxu0 0.0
    %1293 = vmatpush1.msra.mxu0 0.0
    %1294 = vmatprep.subr.mxu0 0.0
    %1295 = vmatpush1.msra.mxu0 0.0
    %1296 = vmatprep.subr.mxu0 0.0
    %1297 = vmatpush1.msra.mxu0 0.0
    %1298 = vmatprep.subr.mxu0 0.0
    %1299 = vmatpush1.msra.mxu0 0.0
    %1300 = vmatprep.subr.mxu0 0.0
    %1301 = vmatpush1.msra.mxu0 0.0
    %1302 = vmatprep.subr.mxu0 0.0
    %1303 = vmatpush1.msra.mxu0 0.0
    %1304 = vmatprep.subr.mxu0 0.0
    %1305 = vmatpush1.msra.mxu0 0.0
    %1306 = vmatprep.subr.mxu0 0.0
    %1307 = vmatpush1.msra.mxu0 0.0
    %1308 = vmatprep.subr.mxu0 0.0
    %1309 = vmatpush1.msra.mxu0 0.0
    %1310 = vmatprep.subr.mxu0 0.0
    %1311 = vmatpush1.msra.mxu0 0.0
    %1312 = vmatprep.subr.mxu0 0.0
    %1313 = vmatpush1.msra.mxu0 0.0
    %1314 = vmatprep.subr.mxu0 0.0
    %1315 = vmatpush1.msra.mxu0 0.0
    %1316 = vmatprep.subr.mxu0 0.0
    %1317 = vmatpush1.msra.mxu0 0.0
    %1318 = vmatprep.subr.mxu0 0.0
    %1319 = vmatpush1.msra.mxu0 0.0
    %1320 = vmatprep.subr.mxu0 0.0
    %1321 = vmatpush1.msra.mxu0 0.0
    %1322 = vmatprep.subr.mxu0 0.0
    %1323 = vmatpush1.msra.mxu0 0.0
    %1324 = vmatprep.subr.mxu0 0.0
    %1325 = vmatpush1.msra.mxu0 0.0
    %1326 = vmatprep.subr.mxu0 0.0
    %1327 = vmatpush1.msra.mxu0 0.0
    %1328 = vmatprep.mubr.f32.mxu0 0.0
    %1329 = vmatmul.mubr.f32.gmra.mrb[0].mxu0 %v1262
    %v1330 = vpop.f32.mrb[0].mxu0
    %v1331 = vadd.f32 %v1259, %v1330
    %v1332 = vpop.f32.mrb[0].mxu0
    %1333 = vdwg.mxu0
    %v1334 = vld [vmem:[#allocation2 + $0x1b0] sm:$0xff]
    %v1335 = vld [vmem:[#allocation2 + $0x1b8] sm:$0x7]
    %v1336 = vld [vmem:[#allocation2 + $0x1c0] sm:$0xff]
    %v1337 = vld [vmem:[#allocation2 + $0x1c8] sm:$0x7]
    %v1339 = vsel %vm36, %v1331, 0
    %v1342 = vsel %vm40, %v1337, 0
    %1344 = vmatprep.subr.mxu0 0.0
    %1345 = vmatpush1.msra.mxu0 %v1336
    %1346 = vmatprep.subr.mxu0 0.0
    %1347 = vmatpush1.msra.mxu0 %v1342
    %1348 = vmatprep.subr.mxu0 0.0
    %1349 = vmatpush1.msra.mxu0 0.0
    %1350 = vmatprep.subr.mxu0 0.0
    %1351 = vmatpush1.msra.mxu0 0.0
    %1352 = vmatprep.subr.mxu0 0.0
    %1353 = vmatpush1.msra.mxu0 0.0
    %1354 = vmatprep.subr.mxu0 0.0
    %1355 = vmatpush1.msra.mxu0 0.0
    %1356 = vmatprep.subr.mxu0 0.0
    %1357 = vmatpush1.msra.mxu0 0.0
    %1358 = vmatprep.subr.mxu0 0.0
    %1359 = vmatpush1.msra.mxu0 0.0
    %1360 = vmatprep.subr.mxu0 0.0
    %1361 = vmatpush1.msra.mxu0 0.0
    %1362 = vmatprep.subr.mxu0 0.0
    %1363 = vmatpush1.msra.mxu0 0.0
    %1364 = vmatprep.subr.mxu0 0.0
    %1365 = vmatpush1.msra.mxu0 0.0
    %1366 = vmatprep.subr.mxu0 0.0
    %1367 = vmatpush1.msra.mxu0 0.0
    %1368 = vmatprep.subr.mxu0 0.0
    %1369 = vmatpush1.msra.mxu0 0.0
    %1370 = vmatprep.subr.mxu0 0.0
    %1371 = vmatpush1.msra.mxu0 0.0
    %1372 = vmatprep.subr.mxu0 0.0
    %1373 = vmatpush1.msra.mxu0 0.0
    %1374 = vmatprep.subr.mxu0 0.0
    %1375 = vmatpush1.msra.mxu0 0.0
    %1376 = vmatprep.subr.mxu0 0.0
    %1377 = vmatpush1.msra.mxu0 0.0
    %1378 = vmatprep.subr.mxu0 0.0
    %1379 = vmatpush1.msra.mxu0 0.0
    %1380 = vmatprep.subr.mxu0 0.0
    %1381 = vmatpush1.msra.mxu0 0.0
    %1382 = vmatprep.subr.mxu0 0.0
    %1383 = vmatpush1.msra.mxu0 0.0
    %1384 = vmatprep.subr.mxu0 0.0
    %1385 = vmatpush1.msra.mxu0 0.0
    %1386 = vmatprep.subr.mxu0 0.0
    %1387 = vmatpush1.msra.mxu0 0.0
    %1388 = vmatprep.subr.mxu0 0.0
    %1389 = vmatpush1.msra.mxu0 0.0
    %1390 = vmatprep.subr.mxu0 0.0
    %1391 = vmatpush1.msra.mxu0 0.0
    %1392 = vmatprep.subr.mxu0 0.0
    %1393 = vmatpush1.msra.mxu0 0.0
    %1394 = vmatprep.subr.mxu0 0.0
    %1395 = vmatpush1.msra.mxu0 0.0
    %1396 = vmatprep.subr.mxu0 0.0
    %1397 = vmatpush1.msra.mxu0 0.0
    %1398 = vmatprep.subr.mxu0 0.0
    %1399 = vmatpush1.msra.mxu0 0.0
    %1400 = vmatprep.subr.mxu0 0.0
    %1401 = vmatpush1.msra.mxu0 0.0
    %1402 = vmatprep.subr.mxu0 0.0
    %1403 = vmatpush1.msra.mxu0 0.0
    %1404 = vmatprep.subr.mxu0 0.0
    %1405 = vmatpush1.msra.mxu0 0.0
    %1406 = vmatprep.subr.mxu0 0.0
    %1407 = vmatpush1.msra.mxu0 0.0
    %1408 = vmatprep.mubr.f32.mxu0 0.0
    %1409 = vmatmul.mubr.f32.gmra.mrb[0].mxu0 %v1339
    %v1410 = vpop.f32.mrb[0].mxu0
    %v1411 = vadd.f32 0.0, %v1410
    %v1412 = vpop.f32.mrb[0].mxu0
    %1413 = vdwg.mxu0
    %v1415 = vsel %vm36, %v1003, 0
    %v1418 = vsel %vm40, %v1335, 0
    %1420 = vmatprep.subr.mxu0 0.0
    %1421 = vmatpush1.msra.mxu0 %v1334
    %1422 = vmatprep.subr.mxu0 0.0
    %1423 = vmatpush1.msra.mxu0 %v1418
    %1424 = vmatprep.subr.mxu0 0.0
    %1425 = vmatpush1.msra.mxu0 0.0
    %1426 = vmatprep.subr.mxu0 0.0
    %1427 = vmatpush1.msra.mxu0 0.0
    %1428 = vmatprep.subr.mxu0 0.0
    %1429 = vmatpush1.msra.mxu0 0.0
    %1430 = vmatprep.subr.mxu0 0.0
    %1431 = vmatpush1.msra.mxu0 0.0
    %1432 = vmatprep.subr.mxu0 0.0
    %1433 = vmatpush1.msra.mxu0 0.0
    %1434 = vmatprep.subr.mxu0 0.0
    %1435 = vmatpush1.msra.mxu0 0.0
    %1436 = vmatprep.subr.mxu0 0.0
    %1437 = vmatpush1.msra.mxu0 0.0
    %1438 = vmatprep.subr.mxu0 0.0
    %1439 = vmatpush1.msra.mxu0 0.0
    %1440 = vmatprep.subr.mxu0 0.0
    %1441 = vmatpush1.msra.mxu0 0.0
    %1442 = vmatprep.subr.mxu0 0.0
    %1443 = vmatpush1.msra.mxu0 0.0
    %1444 = vmatprep.subr.mxu0 0.0
    %1445 = vmatpush1.msra.mxu0 0.0
    %1446 = vmatprep.subr.mxu0 0.0
    %1447 = vmatpush1.msra.mxu0 0.0
    %1448 = vmatprep.subr.mxu0 0.0
    %1449 = vmatpush1.msra.mxu0 0.0
    %1450 = vmatprep.subr.mxu0 0.0
    %1451 = vmatpush1.msra.mxu0 0.0
    %1452 = vmatprep.subr.mxu0 0.0
    %1453 = vmatpush1.msra.mxu0 0.0
    %1454 = vmatprep.subr.mxu0 0.0
    %1455 = vmatpush1.msra.mxu0 0.0
    %1456 = vmatprep.subr.mxu0 0.0
    %1457 = vmatpush1.msra.mxu0 0.0
    %1458 = vmatprep.subr.mxu0 0.0
    %1459 = vmatpush1.msra.mxu0 0.0
    %1460 = vmatprep.subr.mxu0 0.0
    %1461 = vmatpush1.msra.mxu0 0.0
    %1462 = vmatprep.subr.mxu0 0.0
    %1463 = vmatpush1.msra.mxu0 0.0
    %1464 = vmatprep.subr.mxu0 0.0
    %1465 = vmatpush1.msra.mxu0 0.0
    %1466 = vmatprep.subr.mxu0 0.0
    %1467 = vmatpush1.msra.mxu0 0.0
    %1468 = vmatprep.subr.mxu0 0.0
    %1469 = vmatpush1.msra.mxu0 0.0
    %1470 = vmatprep.subr.mxu0 0.0
    %1471 = vmatpush1.msra.mxu0 0.0
    %1472 = vmatprep.subr.mxu0 0.0
    %1473 = vmatpush1.msra.mxu0 0.0
    %1474 = vmatprep.subr.mxu0 0.0
    %1475 = vmatpush1.msra.mxu0 0.0
    %1476 = vmatprep.subr.mxu0 0.0
    %1477 = vmatpush1.msra.mxu0 0.0
    %1478 = vmatprep.subr.mxu0 0.0
    %1479 = vmatpush1.msra.mxu0 0.0
    %1480 = vmatprep.subr.mxu0 0.0
    %1481 = vmatpush1.msra.mxu0 0.0
    %1482 = vmatprep.subr.mxu0 0.0
    %1483 = vmatpush1.msra.mxu0 0.0
    %1484 = vmatprep.mubr.f32.mxu0 0.0
    %1485 = vmatmul.mubr.f32.gmra.mrb[0].mxu0 %v1415
    %v1486 = vpop.f32.mrb[0].mxu0
    %v1487 = vadd.f32 %v1411, %v1486
    %v1488 = vpop.f32.mrb[0].mxu0
    %1489 = vdwg.mxu0
    %v1490 = vld [vmem:[#allocation2 + $0x1d0] sm:$0x1]
    %v1491 = vlaneseq
    %v1492 = vshrl.u32 %v1491, 7
    %v1493 = vsub.s32 0, %v1492
    %v1494 = vrot.slane %v1490, %v1493
    %v1495 = vadd.f32 %v1487, %v1494
    %v1496 = vmax.f32 %v1495, 0.0
    %v1497 = vld [vmem:[#allocation2 + $0x1d8] sm:$0xff]
    %v1498 = vld [vmem:[#allocation2 + $0x1e0] sm:$0xff]
    %v1499 = vld [vmem:[#allocation2 + $0x1e8] sm:$0xff]
    %v1500 = vld [vmem:[#allocation2 + $0x1f0] sm:$0xff]
    %v1501 = vld [vmem:[#allocation2 + $0x1f8] sm:$0xff]
    %v1502 = vld [vmem:[#allocation2 + $0x200] sm:$0xf]
    %v1503 = vld [vmem:[#allocation2 + $0x208] sm:$0x1]
    %v1504 = vlaneseq
    %v1505 = vshrl.u32 %v1504, 7
    %v1506 = vsub.s32 0, %v1505
    %v1507 = vrot.slane %v1503, %v1506
    %vm1508 = vcmask 359424
    %v1510 = vsel %vm1508, %v1496, 0
    %v1513 = vsel %vm1010, %v1502, 0
    %1515 = vmatprep.subr.mxu0 0.0
    %1516 = vmatpush1.msra.mxu0 %v1497
    %1517 = vmatprep.subr.mxu0 0.0
    %1518 = vmatpush1.msra.mxu0 %v1498
    %1519 = vmatprep.subr.mxu0 0.0
    %1520 = vmatpush1.msra.mxu0 %v1499
    %1521 = vmatprep.subr.mxu0 0.0
    %1522 = vmatpush1.msra.mxu0 %v1500
    %1523 = vmatprep.subr.mxu0 0.0
    %1524 = vmatpush1.msra.mxu0 %v1501
    %1525 = vmatprep.subr.mxu0 0.0
    %1526 = vmatpush1.msra.mxu0 %v1513
    %1527 = vmatprep.subr.mxu0 0.0
    %1528 = vmatpush1.msra.mxu0 0.0
    %1529 = vmatprep.subr.mxu0 0.0
    %1530 = vmatpush1.msra.mxu0 0.0
    %1531 = vmatprep.subr.mxu0 0.0
    %1532 = vmatpush1.msra.mxu0 0.0
    %1533 = vmatprep.subr.mxu0 0.0
    %1534 = vmatpush1.msra.mxu0 0.0
    %1535 = vmatprep.subr.mxu0 0.0
    %1536 = vmatpush1.msra.mxu0 0.0
    %1537 = vmatprep.subr.mxu0 0.0
    %1538 = vmatpush1.msra.mxu0 0.0
    %1539 = vmatprep.subr.mxu0 0.0
    %1540 = vmatpush1.msra.mxu0 0.0
    %1541 = vmatprep.subr.mxu0 0.0
    %1542 = vmatpush1.msra.mxu0 0.0
    %1543 = vmatprep.subr.mxu0 0.0
    %1544 = vmatpush1.msra.mxu0 0.0
    %1545 = vmatprep.subr.mxu0 0.0
    %1546 = vmatpush1.msra.mxu0 0.0
    %1547 = vmatprep.subr.mxu0 0.0
    %1548 = vmatpush1.msra.mxu0 0.0
    %1549 = vmatprep.subr.mxu0 0.0
    %1550 = vmatpush1.msra.mxu0 0.0
    %1551 = vmatprep.subr.mxu0 0.0
    %1552 = vmatpush1.msra.mxu0 0.0
    %1553 = vmatprep.subr.mxu0 0.0
    %1554 = vmatpush1.msra.mxu0 0.0
    %1555 = vmatprep.subr.mxu0 0.0
    %1556 = vmatpush1.msra.mxu0 0.0
    %1557 = vmatprep.subr.mxu0 0.0
    %1558 = vmatpush1.msra.mxu0 0.0
    %1559 = vmatprep.subr.mxu0 0.0
    %1560 = vmatpush1.msra.mxu0 0.0
    %1561 = vmatprep.subr.mxu0 0.0
    %1562 = vmatpush1.msra.mxu0 0.0
    %1563 = vmatprep.subr.mxu0 0.0
    %1564 = vmatpush1.msra.mxu0 0.0
    %1565 = vmatprep.subr.mxu0 0.0
    %1566 = vmatpush1.msra.mxu0 0.0
    %1567 = vmatprep.subr.mxu0 0.0
    %1568 = vmatpush1.msra.mxu0 0.0
    %1569 = vmatprep.subr.mxu0 0.0
    %1570 = vmatpush1.msra.mxu0 0.0
    %1571 = vmatprep.subr.mxu0 0.0
    %1572 = vmatpush1.msra.mxu0 0.0
    %1573 = vmatprep.subr.mxu0 0.0
    %1574 = vmatpush1.msra.mxu0 0.0
    %1575 = vmatprep.subr.mxu0 0.0
    %1576 = vmatpush1.msra.mxu0 0.0
    %1577 = vmatprep.subr.mxu0 0.0
    %1578 = vmatpush1.msra.mxu0 0.0
    %1579 = vmatprep.mubr.f32.mxu0 0.0
    %1580 = vmatmul.mubr.f32.gmra.mrb[0].mxu0 %v1510
    %v1581 = vpop.f32.mrb[0].mxu0
    %v1582 = vadd.f32 %v1507, %v1581
    %v1583 = vpop.f32.mrb[0].mxu0
    %1584 = vdwg.mxu0
    %1586 = vrot.lane.b32.xlu0 %v446, 14
    %v1587 = vpop.permute.xlu0 %1586
    %1590 = vrot.lane.b32.xlu0 %v1582, 22
    %v1591 = vpop.permute.xlu0 %1590
    %v1593 = vsel %vm908, %v854, %v838
    %vm1594 = vcmask 113664
    %v1595 = vsel %vm1594, %v1593, %v1587
    %vm1596 = vcmask 146432
    %v1597 = vsel %vm1596, %v1595, %v1587
    %vm1598 = vcmask 179200
    %v1599 = vsel %vm1598, %v1597, %v1591
    %vm1600 = vcmask 269312
    %v1601 = vsel %vm1600, %v1599, 0.0
    %1602 = vst [vmem:[%s3] sm:$0xff] %v1601
    // Predicated region
    $region18: #{phys_vae_forward.1} parent=1 // pred_check
      _
    $region19: #{phys_vae_forward.1} parent=1 // pred_check_branch
      %1604 = sbr.rel (0) target = $region21
    $region20: #{phys_vae_forward.1} parent=1 // pred_region
      _
    $region21: #{phys_vae_forward.1} parent=1 // pred_fallthru
      _
    // Predicated region
    $region22: #{phys_vae_forward.1} parent=1 // pred_check
      _
    $region23: #{phys_vae_forward.1} parent=1 // pred_check_branch
      %1606 = sbr.rel (0) target = $region25
    $region24: #{phys_vae_forward.1} parent=1 // pred_region
      _
    $region25: #{phys_vae_forward.1} parent=1 // pred_fallthru
      _
    %1607 = vsyncpa [#allocation3], 1

</llo_original>
